<compile_context>
chip_gen: v7x
topology: tpu7x:2x2x1
jax: 0.10.0
libtpu: 0.0.40
codegen_flags: <defaults>
</compile_context>

<pallas_src>
import functools

import numpy as np
import jax
import jax.numpy as jnp
from jax import lax
from jax.experimental import pallas as pl
from jax.experimental.pallas import tpu as pltpu

VMEM_SPEC = pl.BlockSpec(memory_space=pltpu.MemorySpace.VMEM)
SMEM_SPEC = pl.BlockSpec(memory_space=pltpu.MemorySpace.SMEM)


# ----------------------------- fused Pallas kernel ---------------------------

def _fused_tail_kernel(inv_temp_ref, xr_ref, u_ref,
                       w3_ref, b3_ref, w4_ref, b4_ref, wh_ref, bh_ref,
                       out_ref, *, nz, eps):
    """Fused conv3/conv4(+folded conv5)/heads for BOTH encoders.

    3 bf16 MXU matmuls on block-structured weights; all elementwise math
    (bias, ReLU, Gumbel, sigmoid) in f32; single full-width store.
    """
    # conv3, both encoders (rows interleaved per spatial position): (N,2048)@(2048,192)
    h = jnp.dot(xr_ref[...], w3_ref[...], preferred_element_type=jnp.float32)
    h = jnp.maximum(h + b3_ref[...], 0.0)
    # conv4, block-diagonal: (N,192) @ (192,128)
    h = jnp.dot(h.astype(jnp.bfloat16), w4_ref[...],
                preferred_element_type=jnp.float32)
    h = jnp.maximum(h + b4_ref[...], 0.0)
    # conv5 folded into [linear_y1 | linear_y2 | linear_g]: (N,128) @ (128,24)
    heads = jnp.dot(h.astype(jnp.bfloat16), wh_ref[...],
                    preferred_element_type=jnp.float32) + bh_ref[...]

    # Gumbel-sigmoid on the first nz lanes (z1|z2), 2*sigmoid gate on the rest.
    u = u_ref[...]
    gumbel = -jnp.log(-jnp.log(u + eps) + eps)
    inv_t = inv_temp_ref[0]
    z_branch = jax.nn.sigmoid((heads + gumbel) * inv_t)
    g_branch = 2.0 * jax.nn.sigmoid(heads)
    lane = lax.broadcasted_iota(jnp.int32, heads.shape, 1)
    out_ref[...] = jnp.where(lane < nz, z_branch, g_branch)


# ------------------------------ jitted forward -------------------------------

def _forward_impl(packed, x, inv_temp, key):
    # conv1 for both encoders (Cout concatenated); NCHW in -> NHWC out, so no
    # explicit transpose HLO.
    h = lax.conv_general_dilated(
        x.astype(jnp.float32), packed["w1"], (2, 2), ((1, 1), (1, 1)),
        dimension_numbers=("NCHW", "HWIO", "NHWC"))
    h = jnp.maximum(h + packed["b1"], 0.0)
    # conv2, grouped: group0 = encoder channels, group1 = encoder_g channels.
    h = lax.conv_general_dilated(
        h, packed["w2"], (2, 2), ((1, 1), (1, 1)),
        dimension_numbers=("NHWC", "HWIO", "NHWC"), feature_group_count=2)
    h = jnp.maximum(h + packed["b2"], 0.0)          # (N, hw/4, hw/4, 4*s_dim)

    n = h.shape[0]
    xr = h.reshape(n, -1).astype(jnp.bfloat16)      # contiguous -> free reshape

    latent = packed["bh"].shape[-1] // 3
    u = jax.random.uniform(key, (n, 3 * latent), jnp.float32)

    out = pl.pallas_call(
        functools.partial(_fused_tail_kernel, nz=2 * latent, eps=1e-20),
        out_shape=jax.ShapeDtypeStruct((n, 3 * latent), jnp.float32),
        in_specs=[SMEM_SPEC] + [VMEM_SPEC] * 8,
        out_specs=VMEM_SPEC,
    )(inv_temp, xr, u,
      packed["w3"], packed["b3"], packed["w4"], packed["b4"],
      packed["wh"], packed["bh"])

    return out[:, :latent], out[:, latent:2 * latent], out[:, 2 * latent:]


_forward_jit = jax.jit(_forward_impl)


def forward(packed, x, it, temp_state, key):
    """Mirrors ConvEncoder3_Unsuper2.forward; temp annealing stays host-side."""
    temp_ini, anneal_rate, temp_min = 1.0, 3e-05, 0.05
    temp = temp_state
    if it % 100 == 1:
        temp = float(np.maximum(temp_ini * np.exp(-anneal_rate * it), temp_min))
    inv_temp = jnp.asarray([1.0 / temp], dtype=jnp.float32)
    z1, z2, g1 = _forward_jit(packed, x, inv_temp, key)
    return (z1, z2, g1), temp


# ------------------------- parameter construction ----------------------------

def init_conv(key, cout, cin, k):
    k1, k2 = jax.random.split(key)
    fan_in = cin * k * k
    bound = 1.0 / np.sqrt(fan_in)
    w = jax.random.uniform(k1, (cout, cin, k, k), jnp.float32, -bound, bound)
    b = jax.random.uniform(k2, (cout,), jnp.float32, -bound, bound)
    return w, b


def init_linear(key, out_f, in_f):
    k1, k2 = jax.random.split(key)
    bound = 1.0 / np.sqrt(in_f)
    w = jax.random.uniform(k1, (out_f, in_f), jnp.float32, -bound, bound)
    b = jax.random.uniform(k2, (out_f,), jnp.float32, -bound, bound)
    return w, b


def init_encoder(key, s_dim, n_cin, n_hw):
    ks = jax.random.split(key, 5)
    return [
        init_conv(ks[0], s_dim, n_cin, 4),
        init_conv(ks[1], 2 * s_dim, s_dim, 4),
        init_conv(ks[2], 3 * s_dim, 2 * s_dim, n_hw // 4),
        init_conv(ks[3], 2 * s_dim, 3 * s_dim, 1),
        init_conv(ks[4], s_dim, 2 * s_dim, 1),
    ]


def init_params(key, s_dim, n_cin, n_hw, latent_size):
    ke, keg, k1, k2, kg = jax.random.split(key, 5)
    return {
        "encoder": init_encoder(ke, s_dim, n_cin, n_hw),
        "encoder_g": init_encoder(keg, s_dim, n_cin, n_hw),
        "linear_y1": init_linear(k1, latent_size, s_dim),
        "linear_y2": init_linear(k2, latent_size, s_dim),
        "linear_g": init_linear(kg, latent_size, s_dim),
    }


def pack_params(params):
    """All weight fusion / reshapes hoisted out of the hot path (init time)."""
    (w1e, b1e), (w2e, b2e), (w3e, b3e), (w4e, b4e), (w5e, b5e) = params["encoder"]
    (w1g, b1g), (w2g, b2g), (w3g, b3g), (w4g, b4g), (w5g, b5g) = params["encoder_g"]

    def hwio(w):                       # torch (Cout,Cin,kh,kw) -> (kh,kw,Cin,Cout)
        return jnp.transpose(w, (2, 3, 1, 0))

    def mat(w):                        # conv weight -> (kh*kw*Cin, Cout)
        return hwio(w).reshape(-1, w.shape[0])

    wy1, by1 = params["linear_y1"]
    wy2, by2 = params["linear_y2"]
    wg, bg = params["linear_g"]

    s_dim = w5e.shape[0]
    latent = wy1.shape[0]
    p = w3e.shape[2] * w3e.shape[3]    # spatial positions after conv2
    c2 = w3e.shape[1]                  # conv2 channels per encoder (2*s_dim)

    # fused conv3: rows interleaved to match the (h, w, [ce | cg]) flatten order
    w3e_m = mat(w3e).reshape(p, c2, 3 * s_dim)
    w3g_m = mat(w3g).reshape(p, c2, 3 * s_dim)
    w3 = jnp.zeros((p, 2 * c2, 6 * s_dim), jnp.float32)
    w3 = w3.at[:, :c2, :3 * s_dim].set(w3e_m)
    w3 = w3.at[:, c2:, 3 * s_dim:].set(w3g_m)
    w3 = w3.reshape(p * 2 * c2, 6 * s_dim)
    b3 = jnp.concatenate([b3e, b3g]).reshape(1, -1)

    # fused conv4: block-diagonal
    w4 = jnp.zeros((6 * s_dim, 4 * s_dim), jnp.float32)
    w4 = w4.at[:3 * s_dim, :2 * s_dim].set(mat(w4e))
    w4 = w4.at[3 * s_dim:, 2 * s_dim:].set(mat(w4g))
    b4 = jnp.concatenate([b4e, b4g]).reshape(1, -1)

    # conv5 folded into the heads (no ReLU between conv5 and the linears)
    wy = jnp.concatenate([wy1.T, wy2.T], axis=1)        # (s_dim, 2*latent)
    by = jnp.concatenate([by1, by2])                    # (2*latent,)
    wye = jnp.dot(mat(w5e), wy)                         # (2*s_dim, 2*latent)
    bye = jnp.dot(b5e, wy) + by
    wgg = jnp.dot(mat(w5g), wg.T)                       # (2*s_dim, latent)
    bgg = jnp.dot(b5g, wg.T) + bg
    wh = jnp.zeros((4 * s_dim, 3 * latent), jnp.float32)
    wh = wh.at[:2 * s_dim, :2 * latent].set(wye)
    wh = wh.at[2 * s_dim:, 2 * latent:].set(wgg)
    bh = jnp.concatenate([bye, bgg]).reshape(1, -1)

    return {
        # spatial convs, both encoders fused along Cout (conv2 grouped)
        "w1": jnp.concatenate([hwio(w1e), hwio(w1g)], axis=3),
        "b1": jnp.concatenate([b1e, b1g]),
        "w2": jnp.concatenate([hwio(w2e), hwio(w2g)], axis=3),
        "b2": jnp.concatenate([b2e, b2g]),
        # fused tail (bf16 MXU weights, f32 biases)
        "w3": w3.astype(jnp.bfloat16), "b3": b3,
        "w4": w4.astype(jnp.bfloat16), "b4": b4,
        "wh": wh.astype(jnp.bfloat16), "bh": bh,
    }


# --------------------------------- main --------------------------------------

if __name__ == "__main__":
    s_dim, n_cin, n_hw, latent_size = 32, 4, 16, 8
    batch = 2

    root = jax.random.PRNGKey(0)
    kp, kx, kn1, kn2 = jax.random.split(root, 4)

    params = init_params(kp, s_dim, n_cin, n_hw, latent_size)
    packed = pack_params(params)
    x = jax.random.normal(kx, (batch, n_cin, n_hw, n_hw), jnp.float32)

    (z1, z2, g1), temp = forward(packed, x, it=1, temp_state=1.0, key=kn1)
    jax.block_until_ready((z1, z2, g1))

    # second call with a different temperature / noise: same compiled executable
    (z1b, z2b, g1b), temp = forward(packed, x, it=2, temp_state=temp, key=kn2)
    jax.block_until_ready((z1b, z2b, g1b))

    assert z1.shape == (batch, latent_size)
    assert z2.shape == (batch, latent_size)
    assert g1.shape == (batch, latent_size)
    assert bool(jnp.all(jnp.isfinite(z1)) & jnp.all(jnp.isfinite(z2))
                & jnp.all(jnp.isfinite(g1)))
    assert bool(jnp.all((z1 >= 0.0) & (z1 <= 1.0)))
    assert bool(jnp.all((z2 >= 0.0) & (z2 <= 1.0)))
    assert bool(jnp.all((g1 >= 0.0) & (g1 <= 2.0)))
    print("KERNEL_OK")
</pallas_src>

<mosaic_0001>
module attributes {stable_mosaic.version = 11 : i64} {
  func.func @_fused_tail_kernel(%arg0: memref<1xf32, #tpu.memory_space<smem>>, %arg1: memref<2x2048xbf16, #tpu.memory_space<vmem>>, %arg2: memref<2x24xf32, #tpu.memory_space<vmem>>, %arg3: memref<2048x192xbf16, #tpu.memory_space<vmem>>, %arg4: memref<1x192xf32, #tpu.memory_space<vmem>>, %arg5: memref<192x128xbf16, #tpu.memory_space<vmem>>, %arg6: memref<1x128xf32, #tpu.memory_space<vmem>>, %arg7: memref<128x24xbf16, #tpu.memory_space<vmem>>, %arg8: memref<1x24xf32, #tpu.memory_space<vmem>>, %arg9: memref<2x24xf32, #tpu.memory_space<vmem>>) attributes {dimension_semantics = [], scalar_prefetch = 0 : i64, scratch_operands = 0 : i64, tpu.core_type = #tpu.core_type<tc>} {
    %c0 = arith.constant 0 : index
    %c0_0 = arith.constant 0 : index
    %0 = vector.load %arg1[%c0, %c0_0] : memref<2x2048xbf16, #tpu.memory_space<vmem>>, vector<2x2048xbf16>
    %c0_1 = arith.constant 0 : index
    %c0_2 = arith.constant 0 : index
    %1 = vector.load %arg3[%c0_1, %c0_2] : memref<2048x192xbf16, #tpu.memory_space<vmem>>, vector<2048x192xbf16>
    %cst = arith.constant dense<0.000000e+00> : vector<2x192xf32>
    %2 = tpu.matmul %0, %1, %cst {dimension_numbers = #tpu.dot_dimension_numbers<[1], [0], [0], [1], [0, 0, 1, 1], [], []>} : vector<2x2048xbf16>, vector<2048x192xbf16>, vector<2x192xf32> -> vector<2x192xf32>
    %c0_3 = arith.constant 0 : index
    %c0_4 = arith.constant 0 : index
    %3 = vector.load %arg4[%c0_3, %c0_4] : memref<1x192xf32, #tpu.memory_space<vmem>>, vector<1x192xf32>
    %4 = vector.broadcast %3 : vector<1x192xf32> to vector<2x192xf32>
    %5 = arith.addf %2, %4 : vector<2x192xf32>
    %cst_5 = arith.constant 0.000000e+00 : f32
    %6 = vector.broadcast %cst_5 : f32 to vector<2x192xf32>
    %7 = arith.maximumf %5, %6 : vector<2x192xf32>
    %8 = arith.truncf %7 : vector<2x192xf32> to vector<2x192xbf16>
    %c0_6 = arith.constant 0 : index
    %c0_7 = arith.constant 0 : index
    %9 = vector.load %arg5[%c0_6, %c0_7] : memref<192x128xbf16, #tpu.memory_space<vmem>>, vector<192x128xbf16>
    %cst_8 = arith.constant dense<0.000000e+00> : vector<2x128xf32>
    %10 = tpu.matmul %8, %9, %cst_8 {dimension_numbers = #tpu.dot_dimension_numbers<[1], [0], [0], [1], [0, 0, 1, 1], [], []>} : vector<2x192xbf16>, vector<192x128xbf16>, vector<2x128xf32> -> vector<2x128xf32>
    %c0_9 = arith.constant 0 : index
    %c0_10 = arith.constant 0 : index
    %11 = vector.load %arg6[%c0_9, %c0_10] : memref<1x128xf32, #tpu.memory_space<vmem>>, vector<1x128xf32>
    %12 = vector.broadcast %11 : vector<1x128xf32> to vector<2x128xf32>
    %13 = arith.addf %10, %12 : vector<2x128xf32>
    %cst_11 = arith.constant 0.000000e+00 : f32
    %14 = vector.broadcast %cst_11 : f32 to vector<2x128xf32>
    %15 = arith.maximumf %13, %14 : vector<2x128xf32>
    %16 = arith.truncf %15 : vector<2x128xf32> to vector<2x128xbf16>
    %c0_12 = arith.constant 0 : index
    %c0_13 = arith.constant 0 : index
    %17 = vector.load %arg7[%c0_12, %c0_13] : memref<128x24xbf16, #tpu.memory_space<vmem>>, vector<128x24xbf16>
    %cst_14 = arith.constant dense<0.000000e+00> : vector<2x24xf32>
    %18 = tpu.matmul %16, %17, %cst_14 {dimension_numbers = #tpu.dot_dimension_numbers<[1], [0], [0], [1], [0, 0, 1, 1], [], []>} : vector<2x128xbf16>, vector<128x24xbf16>, vector<2x24xf32> -> vector<2x24xf32>
    %c0_15 = arith.constant 0 : index
    %c0_16 = arith.constant 0 : index
    %19 = vector.load %arg8[%c0_15, %c0_16] : memref<1x24xf32, #tpu.memory_space<vmem>>, vector<1x24xf32>
    %20 = vector.broadcast %19 : vector<1x24xf32> to vector<2x24xf32>
    %21 = arith.addf %18, %20 : vector<2x24xf32>
    %c0_17 = arith.constant 0 : index
    %c0_18 = arith.constant 0 : index
    %22 = vector.load %arg2[%c0_17, %c0_18] : memref<2x24xf32, #tpu.memory_space<vmem>>, vector<2x24xf32>
    %cst_19 = arith.constant 9.99999968E-21 : f32
    %23 = vector.broadcast %cst_19 : f32 to vector<2x24xf32>
    %24 = arith.addf %22, %23 : vector<2x24xf32>
    %25 = math.log %24 : vector<2x24xf32>
    %cst_20 = arith.constant 0.000000e+00 : f32
    %26 = vector.broadcast %cst_20 : f32 to vector<2x24xf32>
    %27 = arith.subf %26, %25 : vector<2x24xf32>
    %cst_21 = arith.constant 9.99999968E-21 : f32
    %28 = vector.broadcast %cst_21 : f32 to vector<2x24xf32>
    %29 = arith.addf %27, %28 : vector<2x24xf32>
    %30 = math.log %29 : vector<2x24xf32>
    %cst_22 = arith.constant 0.000000e+00 : f32
    %31 = vector.broadcast %cst_22 : f32 to vector<2x24xf32>
    %32 = arith.subf %31, %30 : vector<2x24xf32>
    %c0_23 = arith.constant 0 : index
    %33 = memref.load %arg0[%c0_23] : memref<1xf32, #tpu.memory_space<smem>>
    %34 = arith.addf %21, %32 : vector<2x24xf32>
    %35 = vector.broadcast %33 : f32 to vector<2x24xf32>
    %36 = arith.mulf %34, %35 : vector<2x24xf32>
    %37 = arith.negf %36 : vector<2x24xf32>
    %38 = math.exp %37 : vector<2x24xf32>
    %cst_24 = arith.constant 1.000000e+00 : f32
    %39 = vector.broadcast %cst_24 : f32 to vector<2x24xf32>
    %40 = arith.addf %39, %38 : vector<2x24xf32>
    %41 = arith.divf %39, %40 : vector<2x24xf32>
    %42 = arith.negf %21 : vector<2x24xf32>
    %43 = math.exp %42 : vector<2x24xf32>
    %cst_25 = arith.constant 1.000000e+00 : f32
    %44 = vector.broadcast %cst_25 : f32 to vector<2x24xf32>
    %45 = arith.addf %44, %43 : vector<2x24xf32>
    %46 = arith.divf %44, %45 : vector<2x24xf32>
    %cst_26 = arith.constant 2.000000e+00 : f32
    %47 = vector.broadcast %cst_26 : f32 to vector<2x24xf32>
    %48 = arith.mulf %47, %46 : vector<2x24xf32>
    %49 = tpu.iota {dimensions = array<i32: 1>} : vector<2x24xi32>
    %c16_i32 = arith.constant 16 : i32
    %50 = vector.broadcast %c16_i32 : i32 to vector<2x24xi32>
    %51 = arith.cmpi slt, %49, %50 : vector<2x24xi32>
    %52 = arith.select %51, %41, %48 : vector<2x24xi1>, vector<2x24xf32>
    %c0_27 = arith.constant 0 : index
    %c0_28 = arith.constant 0 : index
    %53 = vector.load %arg9[%c0_27, %c0_28] : memref<2x24xf32, #tpu.memory_space<vmem>>, vector<2x24xf32>
    tpu.vector_store %arg9[%c0_27, %c0_28], %52 {strides = array<i32>} : memref<2x24xf32, #tpu.memory_space<vmem>>, vector<2x24xf32>,
    return
  }
}

</mosaic_0001>

<llo_original>
// kernel: _forward_impl.1
$region0: #{_forward_impl.1}
  #allocation0 [shape = 'u32[]', space=smem, size = 0x4, offset = 0x4, fixed_abs, tag = 'smem constant byte address 0x4 - core index']
  #allocation1 [shape = 'u32[144,128]{1,0:T(1,128)}', space=vmem, size = 0x12000, scoped, tag = 'internal scratch']
  #allocation2 [shape = 'f32[1]{0:T(128)S(6)}', space=smem, size = 0x200, scoped, tag = 'scoped memory for _forward_impl.1']
  %s0 = inlined_call_operand.<no memory space> [shape: f32[1], index: 0, kind: input, shape index: {}]
  %s1 = inlined_call_operand.vmem [shape: bf16[2,2048], index: 1, kind: input, shape index: {}]
  %s2 = inlined_call_operand.vmem [shape: f32[2,24], index: 2, kind: input, shape index: {}]
  %s3 = inlined_call_operand.vmem [shape: bf16[2048,192], index: 3, kind: input, shape index: {}]
  %s4 = inlined_call_operand.vmem [shape: f32[1,192], index: 4, kind: input, shape index: {}]
  %s5 = inlined_call_operand.vmem [shape: bf16[192,128], index: 5, kind: input, shape index: {}]
  %s6 = inlined_call_operand.vmem [shape: f32[1,128], index: 6, kind: input, shape index: {}]
  %s7 = inlined_call_operand.vmem [shape: bf16[128,24], index: 7, kind: input, shape index: {}]
  %s8 = inlined_call_operand.vmem [shape: f32[1,24], index: 8, kind: input, shape index: {}]
  %s9 = inlined_call_operand.vmem [shape: f32[2,24], index: 9, kind: output, shape index: {}]
  %s10 = sld [smem:[#allocation0]]
  $region46: #{_forward_impl.1} parent=0
    _
  %s12 = ssub.s32 1, %s10
  %s13 = scalar_select 0, %s12, %s10
  %14 = sst [smem:[#allocation2]] %s0
  // Predicated region
  $region2: #{_forward_impl.1} parent=0 // pred_check
    _
  $region3: #{_forward_impl.1} parent=0 // pred_check_branch
    %16 = sbr.rel (0) target = $region5
  $region4: #{_forward_impl.1} parent=0 // pred_region
    _
  $region5: #{_forward_impl.1} parent=0 // pred_fallthru
    _
  // Predicated region
  $region6: #{_forward_impl.1} parent=0 // pred_check
    _
  $region7: #{_forward_impl.1} parent=0 // pred_check_branch
    %18 = sbr.rel (0) target = $region9
  $region8: #{_forward_impl.1} parent=0 // pred_region
    _
  $region9: #{_forward_impl.1} parent=0 // pred_fallthru
    _
  // Predicated region
  $region10: #{_forward_impl.1} parent=0 // pred_check
    _
  $region11: #{_forward_impl.1} parent=0 // pred_check_branch
    %20 = sbr.rel (0) target = $region13
  $region12: #{_forward_impl.1} parent=0 // pred_region
    _
  $region13: #{_forward_impl.1} parent=0 // pred_fallthru
    _
  // Predicated region
  $region14: #{_forward_impl.1} parent=0 // pred_check
    _
  $region15: #{_forward_impl.1} parent=0 // pred_check_branch
    %22 = sbr.rel (0) target = $region17
  $region16: #{_forward_impl.1} parent=0 // pred_region
    _
  $region17: #{_forward_impl.1} parent=0 // pred_fallthru
    _
  // Predicated region
  $region18: #{_forward_impl.1} parent=0 // pred_check
    _
  $region19: #{_forward_impl.1} parent=0 // pred_check_branch
    %24 = sbr.rel (0) target = $region21
  $region20: #{_forward_impl.1} parent=0 // pred_region
    _
  $region21: #{_forward_impl.1} parent=0 // pred_fallthru
    _
  // Predicated region
  $region22: #{_forward_impl.1} parent=0 // pred_check
    _
  $region23: #{_forward_impl.1} parent=0 // pred_check_branch
    %26 = sbr.rel (0) target = $region25
  $region24: #{_forward_impl.1} parent=0 // pred_region
    _
  $region25: #{_forward_impl.1} parent=0 // pred_fallthru
    _
  // Predicated region
  $region26: #{_forward_impl.1} parent=0 // pred_check
    _
  $region27: #{_forward_impl.1} parent=0 // pred_check_branch
    %28 = sbr.rel (0) target = $region29
  $region28: #{_forward_impl.1} parent=0 // pred_region
    _
  $region29: #{_forward_impl.1} parent=0 // pred_fallthru
    _
  // Predicated region
  $region30: #{_forward_impl.1} parent=0 // pred_check
    _
  $region31: #{_forward_impl.1} parent=0 // pred_check_branch
    %30 = sbr.rel (0) target = $region33
  $region32: #{_forward_impl.1} parent=0 // pred_region
    _
  $region33: #{_forward_impl.1} parent=0 // pred_fallthru
    _
  // Predicated region
  $region34: #{_forward_impl.1} parent=0 // pred_check
    _
  $region35: #{_forward_impl.1} parent=0 // pred_check_branch
    %32 = sbr.rel (0) target = $region37
  $region36: #{_forward_impl.1} parent=0 // pred_region
    _
  $region37: #{_forward_impl.1} parent=0 // pred_fallthru
    _
  %v34 = vld [vmem:[%s1] sm:$0xff]
  %v35 = vld [vmem:[%s1 + $0x8] sm:$0xff]
  %v36 = vld [vmem:[%s3] sm:$0xff]
  %v37 = vld [vmem:[%s3 + $0x8] sm:$0xff]
  %v38 = vld [vmem:[%s3 + $0x10] sm:$0xff]
  %v39 = vld [vmem:[%s3 + $0x18] sm:$0xff]
  %v40 = vld [vmem:[%s3 + $0x20] sm:$0xff]
  %v41 = vld [vmem:[%s3 + $0x28] sm:$0xff]
  %v42 = vld [vmem:[%s3 + $0x30] sm:$0xff]
  %v43 = vld [vmem:[%s3 + $0x38] sm:$0xff]
  %v44 = vld [vmem:[%s3 + $0x40] sm:$0xff]
  %v45 = vld [vmem:[%s3 + $0x48] sm:$0xff]
  %v46 = vld [vmem:[%s3 + $0x50] sm:$0xff]
  %v47 = vld [vmem:[%s3 + $0x58] sm:$0xff]
  %v48 = vld [vmem:[%s3 + $0x60] sm:$0xff]
  %v49 = vld [vmem:[%s3 + $0x68] sm:$0xff]
  %v50 = vld [vmem:[%s3 + $0x70] sm:$0xff]
  %v51 = vld [vmem:[%s3 + $0x78] sm:$0xff]
  %v52 = vld [vmem:[%s3 + $0x80] sm:$0xff]
  %v53 = vld [vmem:[%s3 + $0x88] sm:$0xff]
  %v54 = vld [vmem:[%s3 + $0x90] sm:$0xff]
  %v55 = vld [vmem:[%s3 + $0x98] sm:$0xff]
  %v56 = vld [vmem:[%s3 + $0xa0] sm:$0xff]
  %v57 = vld [vmem:[%s3 + $0xa8] sm:$0xff]
  %v58 = vld [vmem:[%s3 + $0xb0] sm:$0xff]
  %v59 = vld [vmem:[%s3 + $0xb8] sm:$0xff]
  %v60 = vld [vmem:[%s3 + $0xc0] sm:$0xff]
  %v61 = vld [vmem:[%s3 + $0xc8] sm:$0xff]
  %v62 = vld [vmem:[%s3 + $0xd0] sm:$0xff]
  %v63 = vld [vmem:[%s3 + $0xd8] sm:$0xff]
  %v64 = vld [vmem:[%s3 + $0xe0] sm:$0xff]
  %v65 = vld [vmem:[%s3 + $0xe8] sm:$0xff]
  %v66 = vld [vmem:[%s3 + $0xf0] sm:$0xff]
  %v67 = vld [vmem:[%s3 + $0xf8] sm:$0xff]
  %v68 = vld [vmem:[%s3 + $0x100] sm:$0xff]
  %v69 = vld [vmem:[%s3 + $0x108] sm:$0xff]
  %v70 = vld [vmem:[%s3 + $0x110] sm:$0xff]
  %v71 = vld [vmem:[%s3 + $0x118] sm:$0xff]
  %v72 = vld [vmem:[%s3 + $0x120] sm:$0xff]
  %v73 = vld [vmem:[%s3 + $0x128] sm:$0xff]
  %v74 = vld [vmem:[%s3 + $0x130] sm:$0xff]
  %v75 = vld [vmem:[%s3 + $0x138] sm:$0xff]
  %v76 = vld [vmem:[%s3 + $0x140] sm:$0xff]
  %v77 = vld [vmem:[%s3 + $0x148] sm:$0xff]
  %v78 = vld [vmem:[%s3 + $0x150] sm:$0xff]
  %v79 = vld [vmem:[%s3 + $0x158] sm:$0xff]
  %v80 = vld [vmem:[%s3 + $0x160] sm:$0xff]
  %v81 = vld [vmem:[%s3 + $0x168] sm:$0xff]
  %v82 = vld [vmem:[%s3 + $0x170] sm:$0xff]
  %v83 = vld [vmem:[%s3 + $0x178] sm:$0xff]
  %v84 = vld [vmem:[%s3 + $0x180] sm:$0xff]
  %v85 = vld [vmem:[%s3 + $0x188] sm:$0xff]
  %v86 = vld [vmem:[%s3 + $0x190] sm:$0xff]
  %v87 = vld [vmem:[%s3 + $0x198] sm:$0xff]
  %v88 = vld [vmem:[%s3 + $0x1a0] sm:$0xff]
  %v89 = vld [vmem:[%s3 + $0x1a8] sm:$0xff]
  %v90 = vld [vmem:[%s3 + $0x1b0] sm:$0xff]
  %v91 = vld [vmem:[%s3 + $0x1b8] sm:$0xff]
  %v92 = vld [vmem:[%s3 + $0x1c0] sm:$0xff]
  %v93 = vld [vmem:[%s3 + $0x1c8] sm:$0xff]
  %v94 = vld [vmem:[%s3 + $0x1d0] sm:$0xff]
  %v95 = vld [vmem:[%s3 + $0x1d8] sm:$0xff]
  %v96 = vld [vmem:[%s3 + $0x1e0] sm:$0xff]
  %v97 = vld [vmem:[%s3 + $0x1e8] sm:$0xff]
  %v98 = vld [vmem:[%s3 + $0x1f0] sm:$0xff]
  %v99 = vld [vmem:[%s3 + $0x1f8] sm:$0xff]
  %v100 = vld [vmem:[%s3 + $0x200] sm:$0xff]
  %v101 = vld [vmem:[%s3 + $0x208] sm:$0xff]
  %v102 = vld [vmem:[%s3 + $0x210] sm:$0xff]
  %v103 = vld [vmem:[%s3 + $0x218] sm:$0xff]
  %v104 = vld [vmem:[%s3 + $0x220] sm:$0xff]
  %v105 = vld [vmem:[%s3 + $0x228] sm:$0xff]
  %v106 = vld [vmem:[%s3 + $0x230] sm:$0xff]
  %v107 = vld [vmem:[%s3 + $0x238] sm:$0xff]
  %v108 = vld [vmem:[%s3 + $0x240] sm:$0xff]
  %v109 = vld [vmem:[%s3 + $0x248] sm:$0xff]
  %v110 = vld [vmem:[%s3 + $0x250] sm:$0xff]
  %v111 = vld [vmem:[%s3 + $0x258] sm:$0xff]
  %v112 = vld [vmem:[%s3 + $0x260] sm:$0xff]
  %v113 = vld [vmem:[%s3 + $0x268] sm:$0xff]
  %v114 = vld [vmem:[%s3 + $0x270] sm:$0xff]
  %v115 = vld [vmem:[%s3 + $0x278] sm:$0xff]
  %v116 = vld [vmem:[%s3 + $0x280] sm:$0xff]
  %v117 = vld [vmem:[%s3 + $0x288] sm:$0xff]
  %v118 = vld [vmem:[%s3 + $0x290] sm:$0xff]
  %v119 = vld [vmem:[%s3 + $0x298] sm:$0xff]
  %v120 = vld [vmem:[%s3 + $0x2a0] sm:$0xff]
  %v121 = vld [vmem:[%s3 + $0x2a8] sm:$0xff]
  %v122 = vld [vmem:[%s3 + $0x2b0] sm:$0xff]
  %v123 = vld [vmem:[%s3 + $0x2b8] sm:$0xff]
  %v124 = vld [vmem:[%s3 + $0x2c0] sm:$0xff]
  %v125 = vld [vmem:[%s3 + $0x2c8] sm:$0xff]
  %v126 = vld [vmem:[%s3 + $0x2d0] sm:$0xff]
  %v127 = vld [vmem:[%s3 + $0x2d8] sm:$0xff]
  %v128 = vld [vmem:[%s3 + $0x2e0] sm:$0xff]
  %v129 = vld [vmem:[%s3 + $0x2e8] sm:$0xff]
  %v130 = vld [vmem:[%s3 + $0x2f0] sm:$0xff]
  %v131 = vld [vmem:[%s3 + $0x2f8] sm:$0xff]
  %v132 = vld [vmem:[%s3 + $0x300] sm:$0xff]
  %v133 = vld [vmem:[%s3 + $0x308] sm:$0xff]
  %v134 = vld [vmem:[%s3 + $0x310] sm:$0xff]
  %v135 = vld [vmem:[%s3 + $0x318] sm:$0xff]
  %v136 = vld [vmem:[%s3 + $0x320] sm:$0xff]
  %v137 = vld [vmem:[%s3 + $0x328] sm:$0xff]
  %v138 = vld [vmem:[%s3 + $0x330] sm:$0xff]
  %v139 = vld [vmem:[%s3 + $0x338] sm:$0xff]
  %v140 = vld [vmem:[%s3 + $0x340] sm:$0xff]
  %v141 = vld [vmem:[%s3 + $0x348] sm:$0xff]
  %v142 = vld [vmem:[%s3 + $0x350] sm:$0xff]
  %v143 = vld [vmem:[%s3 + $0x358] sm:$0xff]
  %v144 = vld [vmem:[%s3 + $0x360] sm:$0xff]
  %v145 = vld [vmem:[%s3 + $0x368] sm:$0xff]
  %v146 = vld [vmem:[%s3 + $0x370] sm:$0xff]
  %v147 = vld [vmem:[%s3 + $0x378] sm:$0xff]
  %v148 = vld [vmem:[%s3 + $0x380] sm:$0xff]
  %v149 = vld [vmem:[%s3 + $0x388] sm:$0xff]
  %v150 = vld [vmem:[%s3 + $0x390] sm:$0xff]
  %v151 = vld [vmem:[%s3 + $0x398] sm:$0xff]
  %v152 = vld [vmem:[%s3 + $0x3a0] sm:$0xff]
  %v153 = vld [vmem:[%s3 + $0x3a8] sm:$0xff]
  %v154 = vld [vmem:[%s3 + $0x3b0] sm:$0xff]
  %v155 = vld [vmem:[%s3 + $0x3b8] sm:$0xff]
  %v156 = vld [vmem:[%s3 + $0x3c0] sm:$0xff]
  %v157 = vld [vmem:[%s3 + $0x3c8] sm:$0xff]
  %v158 = vld [vmem:[%s3 + $0x3d0] sm:$0xff]
  %v159 = vld [vmem:[%s3 + $0x3d8] sm:$0xff]
  %v160 = vld [vmem:[%s3 + $0x3e0] sm:$0xff]
  %v161 = vld [vmem:[%s3 + $0x3e8] sm:$0xff]
  %v162 = vld [vmem:[%s3 + $0x3f0] sm:$0xff]
  %v163 = vld [vmem:[%s3 + $0x3f8] sm:$0xff]
  %v164 = vld [vmem:[%s3 + $0x400] sm:$0xff]
  %v165 = vld [vmem:[%s3 + $0x408] sm:$0xff]
  %v166 = vld [vmem:[%s3 + $0x410] sm:$0xff]
  %v167 = vld [vmem:[%s3 + $0x418] sm:$0xff]
  %v168 = vld [vmem:[%s3 + $0x420] sm:$0xff]
  %v169 = vld [vmem:[%s3 + $0x428] sm:$0xff]
  %v170 = vld [vmem:[%s3 + $0x430] sm:$0xff]
  %v171 = vld [vmem:[%s3 + $0x438] sm:$0xff]
  %v172 = vld [vmem:[%s3 + $0x440] sm:$0xff]
  %v173 = vld [vmem:[%s3 + $0x448] sm:$0xff]
  %v174 = vld [vmem:[%s3 + $0x450] sm:$0xff]
  %v175 = vld [vmem:[%s3 + $0x458] sm:$0xff]
  %v176 = vld [vmem:[%s3 + $0x460] sm:$0xff]
  %v177 = vld [vmem:[%s3 + $0x468] sm:$0xff]
  %v178 = vld [vmem:[%s3 + $0x470] sm:$0xff]
  %v179 = vld [vmem:[%s3 + $0x478] sm:$0xff]
  %v180 = vld [vmem:[%s3 + $0x480] sm:$0xff]
  %v181 = vld [vmem:[%s3 + $0x488] sm:$0xff]
  %v182 = vld [vmem:[%s3 + $0x490] sm:$0xff]
  %v183 = vld [vmem:[%s3 + $0x498] sm:$0xff]
  %v184 = vld [vmem:[%s3 + $0x4a0] sm:$0xff]
  %v185 = vld [vmem:[%s3 + $0x4a8] sm:$0xff]
  %v186 = vld [vmem:[%s3 + $0x4b0] sm:$0xff]
  %v187 = vld [vmem:[%s3 + $0x4b8] sm:$0xff]
  %v188 = vld [vmem:[%s3 + $0x4c0] sm:$0xff]
  %v189 = vld [vmem:[%s3 + $0x4c8] sm:$0xff]
  %v190 = vld [vmem:[%s3 + $0x4d0] sm:$0xff]
  %v191 = vld [vmem:[%s3 + $0x4d8] sm:$0xff]
  %v192 = vld [vmem:[%s3 + $0x4e0] sm:$0xff]
  %v193 = vld [vmem:[%s3 + $0x4e8] sm:$0xff]
  %v194 = vld [vmem:[%s3 + $0x4f0] sm:$0xff]
  %v195 = vld [vmem:[%s3 + $0x4f8] sm:$0xff]
  %v196 = vld [vmem:[%s3 + $0x500] sm:$0xff]
  %v197 = vld [vmem:[%s3 + $0x508] sm:$0xff]
  %v198 = vld [vmem:[%s3 + $0x510] sm:$0xff]
  %v199 = vld [vmem:[%s3 + $0x518] sm:$0xff]
  %v200 = vld [vmem:[%s3 + $0x520] sm:$0xff]
  %v201 = vld [vmem:[%s3 + $0x528] sm:$0xff]
  %v202 = vld [vmem:[%s3 + $0x530] sm:$0xff]
  %v203 = vld [vmem:[%s3 + $0x538] sm:$0xff]
  %v204 = vld [vmem:[%s3 + $0x540] sm:$0xff]
  %v205 = vld [vmem:[%s3 + $0x548] sm:$0xff]
  %v206 = vld [vmem:[%s3 + $0x550] sm:$0xff]
  %v207 = vld [vmem:[%s3 + $0x558] sm:$0xff]
  %v208 = vld [vmem:[%s3 + $0x560] sm:$0xff]
  %v209 = vld [vmem:[%s3 + $0x568] sm:$0xff]
  %v210 = vld [vmem:[%s3 + $0x570] sm:$0xff]
  %v211 = vld [vmem:[%s3 + $0x578] sm:$0xff]
  %v212 = vld [vmem:[%s3 + $0x580] sm:$0xff]
  %v213 = vld [vmem:[%s3 + $0x588] sm:$0xff]
  %v214 = vld [vmem:[%s3 + $0x590] sm:$0xff]
  %v215 = vld [vmem:[%s3 + $0x598] sm:$0xff]
  %v216 = vld [vmem:[%s3 + $0x5a0] sm:$0xff]
  %v217 = vld [vmem:[%s3 + $0x5a8] sm:$0xff]
  %v218 = vld [vmem:[%s3 + $0x5b0] sm:$0xff]
  %v219 = vld [vmem:[%s3 + $0x5b8] sm:$0xff]
  %v220 = vld [vmem:[%s3 + $0x5c0] sm:$0xff]
  %v221 = vld [vmem:[%s3 + $0x5c8] sm:$0xff]
  %v222 = vld [vmem:[%s3 + $0x5d0] sm:$0xff]
  %v223 = vld [vmem:[%s3 + $0x5d8] sm:$0xff]
  %v224 = vld [vmem:[%s3 + $0x5e0] sm:$0xff]
  %v225 = vld [vmem:[%s3 + $0x5e8] sm:$0xff]
  %v226 = vld [vmem:[%s3 + $0x5f0] sm:$0xff]
  %v227 = vld [vmem:[%s3 + $0x5f8] sm:$0xff]
  %v228 = vld [vmem:[%s3 + $0x600] sm:$0xff]
  %v229 = vld [vmem:[%s3 + $0x608] sm:$0xff]
  %v230 = vld [vmem:[%s3 + $0x610] sm:$0xff]
  %v231 = vld [vmem:[%s3 + $0x618] sm:$0xff]
  %v232 = vld [vmem:[%s3 + $0x620] sm:$0xff]
  %v233 = vld [vmem:[%s3 + $0x628] sm:$0xff]
  %v234 = vld [vmem:[%s3 + $0x630] sm:$0xff]
  %v235 = vld [vmem:[%s3 + $0x638] sm:$0xff]
  %v236 = vld [vmem:[%s3 + $0x640] sm:$0xff]
  %v237 = vld [vmem:[%s3 + $0x648] sm:$0xff]
  %v238 = vld [vmem:[%s3 + $0x650] sm:$0xff]
  %v239 = vld [vmem:[%s3 + $0x658] sm:$0xff]
  %v240 = vld [vmem:[%s3 + $0x660] sm:$0xff]
  %v241 = vld [vmem:[%s3 + $0x668] sm:$0xff]
  %v242 = vld [vmem:[%s3 + $0x670] sm:$0xff]
  %v243 = vld [vmem:[%s3 + $0x678] sm:$0xff]
  %v244 = vld [vmem:[%s3 + $0x680] sm:$0xff]
  %v245 = vld [vmem:[%s3 + $0x688] sm:$0xff]
  %v246 = vld [vmem:[%s3 + $0x690] sm:$0xff]
  %v247 = vld [vmem:[%s3 + $0x698] sm:$0xff]
  %v248 = vld [vmem:[%s3 + $0x6a0] sm:$0xff]
  %v249 = vld [vmem:[%s3 + $0x6a8] sm:$0xff]
  %v250 = vld [vmem:[%s3 + $0x6b0] sm:$0xff]
  %v251 = vld [vmem:[%s3 + $0x6b8] sm:$0xff]
  %v252 = vld [vmem:[%s3 + $0x6c0] sm:$0xff]
  %v253 = vld [vmem:[%s3 + $0x6c8] sm:$0xff]
  %v254 = vld [vmem:[%s3 + $0x6d0] sm:$0xff]
  %v255 = vld [vmem:[%s3 + $0x6d8] sm:$0xff]
  %v256 = vld [vmem:[%s3 + $0x6e0] sm:$0xff]
  %v257 = vld [vmem:[%s3 + $0x6e8] sm:$0xff]
  %v258 = vld [vmem:[%s3 + $0x6f0] sm:$0xff]
  %v259 = vld [vmem:[%s3 + $0x6f8] sm:$0xff]
  %v260 = vld [vmem:[%s3 + $0x700] sm:$0xff]
  %v261 = vld [vmem:[%s3 + $0x708] sm:$0xff]
  %v262 = vld [vmem:[%s3 + $0x710] sm:$0xff]
  %v263 = vld [vmem:[%s3 + $0x718] sm:$0xff]
  %v264 = vld [vmem:[%s3 + $0x720] sm:$0xff]
  %v265 = vld [vmem:[%s3 + $0x728] sm:$0xff]
  %v266 = vld [vmem:[%s3 + $0x730] sm:$0xff]
  %v267 = vld [vmem:[%s3 + $0x738] sm:$0xff]
  %v268 = vld [vmem:[%s3 + $0x740] sm:$0xff]
  %v269 = vld [vmem:[%s3 + $0x748] sm:$0xff]
  %v270 = vld [vmem:[%s3 + $0x750] sm:$0xff]
  %v271 = vld [vmem:[%s3 + $0x758] sm:$0xff]
  %v272 = vld [vmem:[%s3 + $0x760] sm:$0xff]
  %v273 = vld [vmem:[%s3 + $0x768] sm:$0xff]
  %v274 = vld [vmem:[%s3 + $0x770] sm:$0xff]
  %v275 = vld [vmem:[%s3 + $0x778] sm:$0xff]
  %v276 = vld [vmem:[%s3 + $0x780] sm:$0xff]
  %v277 = vld [vmem:[%s3 + $0x788] sm:$0xff]
  %v278 = vld [vmem:[%s3 + $0x790] sm:$0xff]
  %v279 = vld [vmem:[%s3 + $0x798] sm:$0xff]
  %v280 = vld [vmem:[%s3 + $0x7a0] sm:$0xff]
  %v281 = vld [vmem:[%s3 + $0x7a8] sm:$0xff]
  %v282 = vld [vmem:[%s3 + $0x7b0] sm:$0xff]
  %v283 = vld [vmem:[%s3 + $0x7b8] sm:$0xff]
  %v284 = vld [vmem:[%s3 + $0x7c0] sm:$0xff]
  %v285 = vld [vmem:[%s3 + $0x7c8] sm:$0xff]
  %v286 = vld [vmem:[%s3 + $0x7d0] sm:$0xff]
  %v287 = vld [vmem:[%s3 + $0x7d8] sm:$0xff]
  %v288 = vld [vmem:[%s3 + $0x7e0] sm:$0xff]
  %v289 = vld [vmem:[%s3 + $0x7e8] sm:$0xff]
  %v290 = vld [vmem:[%s3 + $0x7f0] sm:$0xff]
  %v291 = vld [vmem:[%s3 + $0x7f8] sm:$0xff]
  %v292 = vld [vmem:[%s4] sm:$0x3]
  %v294 = vlaneseq
  %v295 = vshrl.u32 %v294, 7
  %v296 = vsub.s32 0, %v295
  %v297 = vrot.slane %v292, %v296
  %v298 = vlaneseq
  %v299 = vshrl.u32 %v298, 7
  %v300 = vsub.s32 1, %v299
  %v301 = vrot.slane %v292, %v300
  %v306 = vcombine.high %v34, %v34
  %v308 = vunpack.c.l.s4 1966171168
  %v309 = vunpack.c.0.s8 %v308
  %v310 = vlaneseq
  %v311 = vshrl.u32 %v310, 7
  %v312 = vsub.s32 %v309, %v311
  %v313 = vrot.slane %v34, %v312
  %v315 = vunpack.c.l.s4 1966171168
  %v316 = vunpack.c.0.s8 %v315
  %v317 = vlaneseq
  %v318 = vshrl.u32 %v317, 7
  %v319 = vsub.s32 %v316, %v318
  %v320 = vrot.slane %v306, %v319
  %v321 = vcombine.high %v313, %v313
  %v322 = vcombine.high %v320, %v320
  %v324 = vunpack.c.l.s4 1966171168
  %v325 = vunpack.c.0.s8 %v324
  %v326 = vlaneseq
  %v327 = vshrl.u32 %v326, 7
  %v328 = vsub.s32 %v325, %v327
  %v329 = vrot.slane %v313, %v328
  %v331 = vunpack.c.l.s4 1966171168
  %v332 = vunpack.c.0.s8 %v331
  %v333 = vlaneseq
  %v334 = vshrl.u32 %v333, 7
  %v335 = vsub.s32 %v332, %v334
  %v336 = vrot.slane %v320, %v335
  %v338 = vunpack.c.l.s4 1966171168
  %v339 = vunpack.c.0.s8 %v338
  %v340 = vlaneseq
  %v341 = vshrl.u32 %v340, 7
  %v342 = vsub.s32 %v339, %v341
  %v343 = vrot.slane %v321, %v342
  %v345 = vunpack.c.l.s4 1966171168
  %v346 = vunpack.c.0.s8 %v345
  %v347 = vlaneseq
  %v348 = vshrl.u32 %v347, 7
  %v349 = vsub.s32 %v346, %v348
  %v350 = vrot.slane %v322, %v349
  %v351 = vcombine.high %v329, %v329
  %v352 = vcombine.high %v336, %v336
  %v353 = vcombine.high %v343, %v343
  %v354 = vcombine.high %v350, %v350
  %v355 = vcombine.high %v35, %v35
  %v357 = vunpack.c.l.s4 1966171168
  %v358 = vunpack.c.0.s8 %v357
  %v359 = vlaneseq
  %v360 = vshrl.u32 %v359, 7
  %v361 = vsub.s32 %v358, %v360
  %v362 = vrot.slane %v35, %v361
  %v364 = vunpack.c.l.s4 1966171168
  %v365 = vunpack.c.0.s8 %v364
  %v366 = vlaneseq
  %v367 = vshrl.u32 %v366, 7
  %v368 = vsub.s32 %v365, %v367
  %v369 = vrot.slane %v355, %v368
  %v370 = vcombine.high %v362, %v362
  %v371 = vcombine.high %v369, %v369
  %v373 = vunpack.c.l.s4 1966171168
  %v374 = vunpack.c.0.s8 %v373
  %v375 = vlaneseq
  %v376 = vshrl.u32 %v375, 7
  %v377 = vsub.s32 %v374, %v376
  %v378 = vrot.slane %v362, %v377
  %v380 = vunpack.c.l.s4 1966171168
  %v381 = vunpack.c.0.s8 %v380
  %v382 = vlaneseq
  %v383 = vshrl.u32 %v382, 7
  %v384 = vsub.s32 %v381, %v383
  %v385 = vrot.slane %v369, %v384
  %v387 = vunpack.c.l.s4 1966171168
  %v388 = vunpack.c.0.s8 %v387
  %v389 = vlaneseq
  %v390 = vshrl.u32 %v389, 7
  %v391 = vsub.s32 %v388, %v390
  %v392 = vrot.slane %v370, %v391
  %v394 = vunpack.c.l.s4 1966171168
  %v395 = vunpack.c.0.s8 %v394
  %v396 = vlaneseq
  %v397 = vshrl.u32 %v396, 7
  %v398 = vsub.s32 %v395, %v397
  %v399 = vrot.slane %v371, %v398
  %v400 = vcombine.high %v378, %v378
  %v401 = vcombine.high %v385, %v385
  %v402 = vcombine.high %v392, %v392
  %v403 = vcombine.high %v399, %v399
  %v676 = vunpack.c.l.b16 %v36
  %v677 = vunpack.c.h.b16 %v36
  %v678 = vunpack.c.l.b16 %v37
  %v679 = vunpack.c.h.b16 %v37
  %v680 = vunpack.c.l.b16 %v38
  %v681 = vunpack.c.h.b16 %v38
  %v682 = vunpack.c.l.b16 %v39
  %v683 = vunpack.c.h.b16 %v39
  %v684 = vunpack.c.l.b16 %v40
  %v685 = vunpack.c.h.b16 %v40
  %v686 = vunpack.c.l.b16 %v41
  %v687 = vunpack.c.h.b16 %v41
  %v688 = vunpack.c.l.b16 %v42
  %v689 = vunpack.c.h.b16 %v42
  %v690 = vunpack.c.l.b16 %v43
  %v691 = vunpack.c.h.b16 %v43
  %v692 = vunpack.c.l.b16 %v44
  %v693 = vunpack.c.h.b16 %v44
  %v694 = vunpack.c.l.b16 %v45
  %v695 = vunpack.c.h.b16 %v45
  %v696 = vunpack.c.l.b16 %v46
  %v697 = vunpack.c.h.b16 %v46
  %v698 = vunpack.c.l.b16 %v47
  %v699 = vunpack.c.h.b16 %v47
  %v700 = vunpack.c.l.b16 %v48
  %v701 = vunpack.c.h.b16 %v48
  %v702 = vunpack.c.l.b16 %v49
  %v703 = vunpack.c.h.b16 %v49
  %v704 = vunpack.c.l.b16 %v50
  %v705 = vunpack.c.h.b16 %v50
  %v706 = vunpack.c.l.b16 %v51
  %v707 = vunpack.c.h.b16 %v51
  %v708 = vunpack.c.l.b16 %v52
  %v709 = vunpack.c.h.b16 %v52
  %v710 = vunpack.c.l.b16 %v53
  %v711 = vunpack.c.h.b16 %v53
  %v712 = vunpack.c.l.b16 %v54
  %v713 = vunpack.c.h.b16 %v54
  %v714 = vunpack.c.l.b16 %v55
  %v715 = vunpack.c.h.b16 %v55
  %v716 = vunpack.c.l.b16 %v56
  %v717 = vunpack.c.h.b16 %v56
  %v718 = vunpack.c.l.b16 %v57
  %v719 = vunpack.c.h.b16 %v57
  %v720 = vunpack.c.l.b16 %v58
  %v721 = vunpack.c.h.b16 %v58
  %v722 = vunpack.c.l.b16 %v59
  %v723 = vunpack.c.h.b16 %v59
  %v724 = vunpack.c.l.b16 %v60
  %v725 = vunpack.c.h.b16 %v60
  %v726 = vunpack.c.l.b16 %v61
  %v727 = vunpack.c.h.b16 %v61
  %v728 = vunpack.c.l.b16 %v62
  %v729 = vunpack.c.h.b16 %v62
  %v730 = vunpack.c.l.b16 %v63
  %v731 = vunpack.c.h.b16 %v63
  %v732 = vunpack.c.l.b16 %v64
  %v733 = vunpack.c.h.b16 %v64
  %v734 = vunpack.c.l.b16 %v65
  %v735 = vunpack.c.h.b16 %v65
  %v736 = vunpack.c.l.b16 %v66
  %v737 = vunpack.c.h.b16 %v66
  %v738 = vunpack.c.l.b16 %v67
  %v739 = vunpack.c.h.b16 %v67
  %v740 = vunpack.c.l.b16 %v68
  %v741 = vunpack.c.h.b16 %v68
  %v742 = vunpack.c.l.b16 %v69
  %v743 = vunpack.c.h.b16 %v69
  %v744 = vunpack.c.l.b16 %v70
  %v745 = vunpack.c.h.b16 %v70
  %v746 = vunpack.c.l.b16 %v71
  %v747 = vunpack.c.h.b16 %v71
  %v748 = vunpack.c.l.b16 %v72
  %v749 = vunpack.c.h.b16 %v72
  %v750 = vunpack.c.l.b16 %v73
  %v751 = vunpack.c.h.b16 %v73
  %v752 = vunpack.c.l.b16 %v74
  %v753 = vunpack.c.h.b16 %v74
  %v754 = vunpack.c.l.b16 %v75
  %v755 = vunpack.c.h.b16 %v75
  %v756 = vunpack.c.l.b16 %v76
  %v757 = vunpack.c.h.b16 %v76
  %v758 = vunpack.c.l.b16 %v77
  %v759 = vunpack.c.h.b16 %v77
  %v760 = vunpack.c.l.b16 %v78
  %v761 = vunpack.c.h.b16 %v78
  %v762 = vunpack.c.l.b16 %v79
  %v763 = vunpack.c.h.b16 %v79
  %v764 = vunpack.c.l.b16 %v80
  %v765 = vunpack.c.h.b16 %v80
  %v766 = vunpack.c.l.b16 %v81
  %v767 = vunpack.c.h.b16 %v81
  %v768 = vunpack.c.l.b16 %v82
  %v769 = vunpack.c.h.b16 %v82
  %v770 = vunpack.c.l.b16 %v83
  %v771 = vunpack.c.h.b16 %v83
  %v772 = vunpack.c.l.b16 %v84
  %v773 = vunpack.c.h.b16 %v84
  %v774 = vunpack.c.l.b16 %v85
  %v775 = vunpack.c.h.b16 %v85
  %v776 = vunpack.c.l.b16 %v86
  %v777 = vunpack.c.h.b16 %v86
  %v778 = vunpack.c.l.b16 %v87
  %v779 = vunpack.c.h.b16 %v87
  %v780 = vunpack.c.l.b16 %v88
  %v781 = vunpack.c.h.b16 %v88
  %v782 = vunpack.c.l.b16 %v89
  %v783 = vunpack.c.h.b16 %v89
  %v784 = vunpack.c.l.b16 %v90
  %v785 = vunpack.c.h.b16 %v90
  %v786 = vunpack.c.l.b16 %v91
  %v787 = vunpack.c.h.b16 %v91
  %v788 = vunpack.c.l.b16 %v92
  %v789 = vunpack.c.h.b16 %v92
  %v790 = vunpack.c.l.b16 %v93
  %v791 = vunpack.c.h.b16 %v93
  %v792 = vunpack.c.l.b16 %v94
  %v793 = vunpack.c.h.b16 %v94
  %v794 = vunpack.c.l.b16 %v95
  %v795 = vunpack.c.h.b16 %v95
  %v796 = vunpack.c.l.b16 %v96
  %v797 = vunpack.c.h.b16 %v96
  %v798 = vunpack.c.l.b16 %v97
  %v799 = vunpack.c.h.b16 %v97
  %v800 = vunpack.c.l.b16 %v98
  %v801 = vunpack.c.h.b16 %v98
  %v802 = vunpack.c.l.b16 %v99
  %v803 = vunpack.c.h.b16 %v99
  %v804 = vunpack.c.l.b16 %v100
  %v805 = vunpack.c.h.b16 %v100
  %v806 = vunpack.c.l.b16 %v101
  %v807 = vunpack.c.h.b16 %v101
  %v808 = vunpack.c.l.b16 %v102
  %v809 = vunpack.c.h.b16 %v102
  %v810 = vunpack.c.l.b16 %v103
  %v811 = vunpack.c.h.b16 %v103
  %v812 = vunpack.c.l.b16 %v104
  %v813 = vunpack.c.h.b16 %v104
  %v814 = vunpack.c.l.b16 %v105
  %v815 = vunpack.c.h.b16 %v105
  %v816 = vunpack.c.l.b16 %v106
  %v817 = vunpack.c.h.b16 %v106
  %v818 = vunpack.c.l.b16 %v107
  %v819 = vunpack.c.h.b16 %v107
  %v820 = vunpack.c.l.b16 %v108
  %v821 = vunpack.c.h.b16 %v108
  %v822 = vunpack.c.l.b16 %v109
  %v823 = vunpack.c.h.b16 %v109
  %v824 = vunpack.c.l.b16 %v110
  %v825 = vunpack.c.h.b16 %v110
  %v826 = vunpack.c.l.b16 %v111
  %v827 = vunpack.c.h.b16 %v111
  %v828 = vunpack.c.l.b16 %v112
  %v829 = vunpack.c.h.b16 %v112
  %v830 = vunpack.c.l.b16 %v113
  %v831 = vunpack.c.h.b16 %v113
  %v832 = vunpack.c.l.b16 %v114
  %v833 = vunpack.c.h.b16 %v114
  %v834 = vunpack.c.l.b16 %v115
  %v835 = vunpack.c.h.b16 %v115
  %v836 = vunpack.c.l.b16 %v116
  %v837 = vunpack.c.h.b16 %v116
  %v838 = vunpack.c.l.b16 %v117
  %v839 = vunpack.c.h.b16 %v117
  %v840 = vunpack.c.l.b16 %v118
  %v841 = vunpack.c.h.b16 %v118
  %v842 = vunpack.c.l.b16 %v119
  %v843 = vunpack.c.h.b16 %v119
  %v844 = vunpack.c.l.b16 %v120
  %v845 = vunpack.c.h.b16 %v120
  %v846 = vunpack.c.l.b16 %v121
  %v847 = vunpack.c.h.b16 %v121
  %v848 = vunpack.c.l.b16 %v122
  %v849 = vunpack.c.h.b16 %v122
  %v850 = vunpack.c.l.b16 %v123
  %v851 = vunpack.c.h.b16 %v123
  %v852 = vunpack.c.l.b16 %v124
  %v853 = vunpack.c.h.b16 %v124
  %v854 = vunpack.c.l.b16 %v125
  %v855 = vunpack.c.h.b16 %v125
  %v856 = vunpack.c.l.b16 %v126
  %v857 = vunpack.c.h.b16 %v126
  %v858 = vunpack.c.l.b16 %v127
  %v859 = vunpack.c.h.b16 %v127
  %v860 = vunpack.c.l.b16 %v128
  %v861 = vunpack.c.h.b16 %v128
  %v862 = vunpack.c.l.b16 %v129
  %v863 = vunpack.c.h.b16 %v129
  %v864 = vunpack.c.l.b16 %v130
  %v865 = vunpack.c.h.b16 %v130
  %v866 = vunpack.c.l.b16 %v131
  %v867 = vunpack.c.h.b16 %v131
  %v868 = vunpack.c.l.b16 %v132
  %v869 = vunpack.c.h.b16 %v132
  %v870 = vunpack.c.l.b16 %v133
  %v871 = vunpack.c.h.b16 %v133
  %v872 = vunpack.c.l.b16 %v134
  %v873 = vunpack.c.h.b16 %v134
  %v874 = vunpack.c.l.b16 %v135
  %v875 = vunpack.c.h.b16 %v135
  %v876 = vunpack.c.l.b16 %v136
  %v877 = vunpack.c.h.b16 %v136
  %v878 = vunpack.c.l.b16 %v137
  %v879 = vunpack.c.h.b16 %v137
  %v880 = vunpack.c.l.b16 %v138
  %v881 = vunpack.c.h.b16 %v138
  %v882 = vunpack.c.l.b16 %v139
  %v883 = vunpack.c.h.b16 %v139
  %v884 = vunpack.c.l.b16 %v140
  %v885 = vunpack.c.h.b16 %v140
  %v886 = vunpack.c.l.b16 %v141
  %v887 = vunpack.c.h.b16 %v141
  %v888 = vunpack.c.l.b16 %v142
  %v889 = vunpack.c.h.b16 %v142
  %v890 = vunpack.c.l.b16 %v143
  %v891 = vunpack.c.h.b16 %v143
  %v892 = vunpack.c.l.b16 %v144
  %v893 = vunpack.c.h.b16 %v144
  %v894 = vunpack.c.l.b16 %v145
  %v895 = vunpack.c.h.b16 %v145
  %v896 = vunpack.c.l.b16 %v146
  %v897 = vunpack.c.h.b16 %v146
  %v898 = vunpack.c.l.b16 %v147
  %v899 = vunpack.c.h.b16 %v147
  %v900 = vunpack.c.l.b16 %v148
  %v901 = vunpack.c.h.b16 %v148
  %v902 = vunpack.c.l.b16 %v149
  %v903 = vunpack.c.h.b16 %v149
  %v904 = vunpack.c.l.b16 %v150
  %v905 = vunpack.c.h.b16 %v150
  %v906 = vunpack.c.l.b16 %v151
  %v907 = vunpack.c.h.b16 %v151
  %v908 = vunpack.c.l.b16 %v152
  %v909 = vunpack.c.h.b16 %v152
  %v910 = vunpack.c.l.b16 %v153
  %v911 = vunpack.c.h.b16 %v153
  %v912 = vunpack.c.l.b16 %v154
  %v913 = vunpack.c.h.b16 %v154
  %v914 = vunpack.c.l.b16 %v155
  %v915 = vunpack.c.h.b16 %v155
  %v916 = vunpack.c.l.b16 %v156
  %v917 = vunpack.c.h.b16 %v156
  %v918 = vunpack.c.l.b16 %v157
  %v919 = vunpack.c.h.b16 %v157
  %v920 = vunpack.c.l.b16 %v158
  %v921 = vunpack.c.h.b16 %v158
  %v922 = vunpack.c.l.b16 %v159
  %v923 = vunpack.c.h.b16 %v159
  %v924 = vunpack.c.l.b16 %v160
  %v925 = vunpack.c.h.b16 %v160
  %v926 = vunpack.c.l.b16 %v161
  %v927 = vunpack.c.h.b16 %v161
  %v928 = vunpack.c.l.b16 %v162
  %v929 = vunpack.c.h.b16 %v162
  %v930 = vunpack.c.l.b16 %v163
  %v931 = vunpack.c.h.b16 %v163
  %v932 = vunpack.c.l.b16 %v164
  %v933 = vunpack.c.h.b16 %v164
  %v934 = vunpack.c.l.b16 %v165
  %v935 = vunpack.c.h.b16 %v165
  %v936 = vunpack.c.l.b16 %v166
  %v937 = vunpack.c.h.b16 %v166
  %v938 = vunpack.c.l.b16 %v167
  %v939 = vunpack.c.h.b16 %v167
  %v940 = vunpack.c.l.b16 %v168
  %v941 = vunpack.c.h.b16 %v168
  %v942 = vunpack.c.l.b16 %v169
  %v943 = vunpack.c.h.b16 %v169
  %v944 = vunpack.c.l.b16 %v170
  %v945 = vunpack.c.h.b16 %v170
  %v946 = vunpack.c.l.b16 %v171
  %v947 = vunpack.c.h.b16 %v171
  %v948 = vunpack.c.l.b16 %v172
  %v949 = vunpack.c.h.b16 %v172
  %v950 = vunpack.c.l.b16 %v173
  %v951 = vunpack.c.h.b16 %v173
  %v952 = vunpack.c.l.b16 %v174
  %v953 = vunpack.c.h.b16 %v174
  %v954 = vunpack.c.l.b16 %v175
  %v955 = vunpack.c.h.b16 %v175
  %v956 = vunpack.c.l.b16 %v176
  %v957 = vunpack.c.h.b16 %v176
  %v958 = vunpack.c.l.b16 %v177
  %v959 = vunpack.c.h.b16 %v177
  %v960 = vunpack.c.l.b16 %v178
  %v961 = vunpack.c.h.b16 %v178
  %v962 = vunpack.c.l.b16 %v179
  %v963 = vunpack.c.h.b16 %v179
  %v964 = vunpack.c.l.b16 %v180
  %v965 = vunpack.c.h.b16 %v180
  %v966 = vunpack.c.l.b16 %v181
  %v967 = vunpack.c.h.b16 %v181
  %v968 = vunpack.c.l.b16 %v182
  %v969 = vunpack.c.h.b16 %v182
  %v970 = vunpack.c.l.b16 %v183
  %v971 = vunpack.c.h.b16 %v183
  %v972 = vunpack.c.l.b16 %v184
  %v973 = vunpack.c.h.b16 %v184
  %v974 = vunpack.c.l.b16 %v185
  %v975 = vunpack.c.h.b16 %v185
  %v976 = vunpack.c.l.b16 %v186
  %v977 = vunpack.c.h.b16 %v186
  %v978 = vunpack.c.l.b16 %v187
  %v979 = vunpack.c.h.b16 %v187
  %v980 = vunpack.c.l.b16 %v188
  %v981 = vunpack.c.h.b16 %v188
  %v982 = vunpack.c.l.b16 %v189
  %v983 = vunpack.c.h.b16 %v189
  %v984 = vunpack.c.l.b16 %v190
  %v985 = vunpack.c.h.b16 %v190
  %v986 = vunpack.c.l.b16 %v191
  %v987 = vunpack.c.h.b16 %v191
  %v988 = vunpack.c.l.b16 %v192
  %v989 = vunpack.c.h.b16 %v192
  %v990 = vunpack.c.l.b16 %v193
  %v991 = vunpack.c.h.b16 %v193
  %v992 = vunpack.c.l.b16 %v194
  %v993 = vunpack.c.h.b16 %v194
  %v994 = vunpack.c.l.b16 %v195
  %v995 = vunpack.c.h.b16 %v195
  %v996 = vunpack.c.l.b16 %v196
  %v997 = vunpack.c.h.b16 %v196
  %v998 = vunpack.c.l.b16 %v197
  %v999 = vunpack.c.h.b16 %v197
  %v1000 = vunpack.c.l.b16 %v198
  %v1001 = vunpack.c.h.b16 %v198
  %v1002 = vunpack.c.l.b16 %v199
  %v1003 = vunpack.c.h.b16 %v199
  %v1004 = vunpack.c.l.b16 %v200
  %v1005 = vunpack.c.h.b16 %v200
  %v1006 = vunpack.c.l.b16 %v201
  %v1007 = vunpack.c.h.b16 %v201
  %v1008 = vunpack.c.l.b16 %v202
  %v1009 = vunpack.c.h.b16 %v202
  %v1010 = vunpack.c.l.b16 %v203
  %v1011 = vunpack.c.h.b16 %v203
  %v1012 = vunpack.c.l.b16 %v204
  %v1013 = vunpack.c.h.b16 %v204
  %v1014 = vunpack.c.l.b16 %v205
  %v1015 = vunpack.c.h.b16 %v205
  %v1016 = vunpack.c.l.b16 %v206
  %v1017 = vunpack.c.h.b16 %v206
  %v1018 = vunpack.c.l.b16 %v207
  %v1019 = vunpack.c.h.b16 %v207
  %v1020 = vunpack.c.l.b16 %v208
  %v1021 = vunpack.c.h.b16 %v208
  %v1022 = vunpack.c.l.b16 %v209
  %v1023 = vunpack.c.h.b16 %v209
  %v1024 = vunpack.c.l.b16 %v210
  %v1025 = vunpack.c.h.b16 %v210
  %v1026 = vunpack.c.l.b16 %v211
  %v1027 = vunpack.c.h.b16 %v211
  %v1028 = vunpack.c.l.b16 %v212
  %v1029 = vunpack.c.h.b16 %v212
  %v1030 = vunpack.c.l.b16 %v213
  %v1031 = vunpack.c.h.b16 %v213
  %v1032 = vunpack.c.l.b16 %v214
  %v1033 = vunpack.c.h.b16 %v214
  %v1034 = vunpack.c.l.b16 %v215
  %v1035 = vunpack.c.h.b16 %v215
  %v1036 = vunpack.c.l.b16 %v216
  %v1037 = vunpack.c.h.b16 %v216
  %v1038 = vunpack.c.l.b16 %v217
  %v1039 = vunpack.c.h.b16 %v217
  %v1040 = vunpack.c.l.b16 %v218
  %v1041 = vunpack.c.h.b16 %v218
  %v1042 = vunpack.c.l.b16 %v219
  %v1043 = vunpack.c.h.b16 %v219
  %v1044 = vunpack.c.l.b16 %v220
  %v1045 = vunpack.c.h.b16 %v220
  %v1046 = vunpack.c.l.b16 %v221
  %v1047 = vunpack.c.h.b16 %v221
  %v1048 = vunpack.c.l.b16 %v222
  %v1049 = vunpack.c.h.b16 %v222
  %v1050 = vunpack.c.l.b16 %v223
  %v1051 = vunpack.c.h.b16 %v223
  %v1052 = vunpack.c.l.b16 %v224
  %v1053 = vunpack.c.h.b16 %v224
  %v1054 = vunpack.c.l.b16 %v225
  %v1055 = vunpack.c.h.b16 %v225
  %v1056 = vunpack.c.l.b16 %v226
  %v1057 = vunpack.c.h.b16 %v226
  %v1058 = vunpack.c.l.b16 %v227
  %v1059 = vunpack.c.h.b16 %v227
  %v1060 = vunpack.c.l.b16 %v228
  %v1061 = vunpack.c.h.b16 %v228
  %v1062 = vunpack.c.l.b16 %v229
  %v1063 = vunpack.c.h.b16 %v229
  %v1064 = vunpack.c.l.b16 %v230
  %v1065 = vunpack.c.h.b16 %v230
  %v1066 = vunpack.c.l.b16 %v231
  %v1067 = vunpack.c.h.b16 %v231
  %v1068 = vunpack.c.l.b16 %v232
  %v1069 = vunpack.c.h.b16 %v232
  %v1070 = vunpack.c.l.b16 %v233
  %v1071 = vunpack.c.h.b16 %v233
  %v1072 = vunpack.c.l.b16 %v234
  %v1073 = vunpack.c.h.b16 %v234
  %v1074 = vunpack.c.l.b16 %v235
  %v1075 = vunpack.c.h.b16 %v235
  %v1076 = vunpack.c.l.b16 %v236
  %v1077 = vunpack.c.h.b16 %v236
  %v1078 = vunpack.c.l.b16 %v237
  %v1079 = vunpack.c.h.b16 %v237
  %v1080 = vunpack.c.l.b16 %v238
  %v1081 = vunpack.c.h.b16 %v238
  %v1082 = vunpack.c.l.b16 %v239
  %v1083 = vunpack.c.h.b16 %v239
  %v1084 = vunpack.c.l.b16 %v240
  %v1085 = vunpack.c.h.b16 %v240
  %v1086 = vunpack.c.l.b16 %v241
  %v1087 = vunpack.c.h.b16 %v241
  %v1088 = vunpack.c.l.b16 %v242
  %v1089 = vunpack.c.h.b16 %v242
  %v1090 = vunpack.c.l.b16 %v243
  %v1091 = vunpack.c.h.b16 %v243
  %v1092 = vunpack.c.l.b16 %v244
  %v1093 = vunpack.c.h.b16 %v244
  %v1094 = vunpack.c.l.b16 %v245
  %v1095 = vunpack.c.h.b16 %v245
  %v1096 = vunpack.c.l.b16 %v246
  %v1097 = vunpack.c.h.b16 %v246
  %v1098 = vunpack.c.l.b16 %v247
  %v1099 = vunpack.c.h.b16 %v247
  %v1100 = vunpack.c.l.b16 %v248
  %v1101 = vunpack.c.h.b16 %v248
  %v1102 = vunpack.c.l.b16 %v249
  %v1103 = vunpack.c.h.b16 %v249
  %v1104 = vunpack.c.l.b16 %v250
  %v1105 = vunpack.c.h.b16 %v250
  %v1106 = vunpack.c.l.b16 %v251
  %v1107 = vunpack.c.h.b16 %v251
  %v1108 = vunpack.c.l.b16 %v252
  %v1109 = vunpack.c.h.b16 %v252
  %v1110 = vunpack.c.l.b16 %v253
  %v1111 = vunpack.c.h.b16 %v253
  %v1112 = vunpack.c.l.b16 %v254
  %v1113 = vunpack.c.h.b16 %v254
  %v1114 = vunpack.c.l.b16 %v255
  %v1115 = vunpack.c.h.b16 %v255
  %v1116 = vunpack.c.l.b16 %v256
  %v1117 = vunpack.c.h.b16 %v256
  %v1118 = vunpack.c.l.b16 %v257
  %v1119 = vunpack.c.h.b16 %v257
  %v1120 = vunpack.c.l.b16 %v258
  %v1121 = vunpack.c.h.b16 %v258
  %v1122 = vunpack.c.l.b16 %v259
  %v1123 = vunpack.c.h.b16 %v259
  %v1124 = vunpack.c.l.b16 %v260
  %v1125 = vunpack.c.h.b16 %v260
  %v1126 = vunpack.c.l.b16 %v261
  %v1127 = vunpack.c.h.b16 %v261
  %v1128 = vunpack.c.l.b16 %v262
  %v1129 = vunpack.c.h.b16 %v262
  %v1130 = vunpack.c.l.b16 %v263
  %v1131 = vunpack.c.h.b16 %v263
  %v1132 = vunpack.c.l.b16 %v264
  %v1133 = vunpack.c.h.b16 %v264
  %v1134 = vunpack.c.l.b16 %v265
  %v1135 = vunpack.c.h.b16 %v265
  %v1136 = vunpack.c.l.b16 %v266
  %v1137 = vunpack.c.h.b16 %v266
  %v1138 = vunpack.c.l.b16 %v267
  %v1139 = vunpack.c.h.b16 %v267
  %v1140 = vunpack.c.l.b16 %v268
  %v1141 = vunpack.c.h.b16 %v268
  %v1142 = vunpack.c.l.b16 %v269
  %v1143 = vunpack.c.h.b16 %v269
  %v1144 = vunpack.c.l.b16 %v270
  %v1145 = vunpack.c.h.b16 %v270
  %v1146 = vunpack.c.l.b16 %v271
  %v1147 = vunpack.c.h.b16 %v271
  %v1148 = vunpack.c.l.b16 %v272
  %v1149 = vunpack.c.h.b16 %v272
  %v1150 = vunpack.c.l.b16 %v273
  %v1151 = vunpack.c.h.b16 %v273
  %v1152 = vunpack.c.l.b16 %v274
  %v1153 = vunpack.c.h.b16 %v274
  %v1154 = vunpack.c.l.b16 %v275
  %v1155 = vunpack.c.h.b16 %v275
  %v1156 = vunpack.c.l.b16 %v276
  %v1157 = vunpack.c.h.b16 %v276
  %v1158 = vunpack.c.l.b16 %v277
  %v1159 = vunpack.c.h.b16 %v277
  %v1160 = vunpack.c.l.b16 %v278
  %v1161 = vunpack.c.h.b16 %v278
  %v1162 = vunpack.c.l.b16 %v279
  %v1163 = vunpack.c.h.b16 %v279
  %v1164 = vunpack.c.l.b16 %v280
  %v1165 = vunpack.c.h.b16 %v280
  %v1166 = vunpack.c.l.b16 %v281
  %v1167 = vunpack.c.h.b16 %v281
  %v1168 = vunpack.c.l.b16 %v282
  %v1169 = vunpack.c.h.b16 %v282
  %v1170 = vunpack.c.l.b16 %v283
  %v1171 = vunpack.c.h.b16 %v283
  %v1172 = vunpack.c.l.b16 %v284
  %v1173 = vunpack.c.h.b16 %v284
  %v1174 = vunpack.c.l.b16 %v285
  %v1175 = vunpack.c.h.b16 %v285
  %v1176 = vunpack.c.l.b16 %v286
  %v1177 = vunpack.c.h.b16 %v286
  %v1178 = vunpack.c.l.b16 %v287
  %v1179 = vunpack.c.h.b16 %v287
  %v1180 = vunpack.c.l.b16 %v288
  %v1181 = vunpack.c.h.b16 %v288
  %v1182 = vunpack.c.l.b16 %v289
  %v1183 = vunpack.c.h.b16 %v289
  %v1184 = vunpack.c.l.b16 %v290
  %v1185 = vunpack.c.h.b16 %v290
  %v1186 = vunpack.c.l.b16 %v291
  %v1187 = vunpack.c.h.b16 %v291
  %v1188 = vpack.c.b16 %v678, %v676
  %v1189 = vpack.c.b16 %v679, %v677
  %v1190 = vpack.c.b16 %v682, %v680
  %v1191 = vpack.c.b16 %v683, %v681
  %v1192 = vpack.c.b16 %v686, %v684
  %v1193 = vpack.c.b16 %v687, %v685
  %v1194 = vpack.c.b16 %v690, %v688
  %v1195 = vpack.c.b16 %v691, %v689
  %v1196 = vpack.c.b16 %v694, %v692
  %v1197 = vpack.c.b16 %v695, %v693
  %v1198 = vpack.c.b16 %v698, %v696
  %v1199 = vpack.c.b16 %v699, %v697
  %v1200 = vpack.c.b16 %v702, %v700
  %v1201 = vpack.c.b16 %v703, %v701
  %v1202 = vpack.c.b16 %v706, %v704
  %v1203 = vpack.c.b16 %v707, %v705
  %v1204 = vpack.c.b16 %v710, %v708
  %v1205 = vpack.c.b16 %v711, %v709
  %v1206 = vpack.c.b16 %v714, %v712
  %v1207 = vpack.c.b16 %v715, %v713
  %v1208 = vpack.c.b16 %v718, %v716
  %v1209 = vpack.c.b16 %v719, %v717
  %v1210 = vpack.c.b16 %v722, %v720
  %v1211 = vpack.c.b16 %v723, %v721
  %v1212 = vpack.c.b16 %v726, %v724
  %v1213 = vpack.c.b16 %v727, %v725
  %v1214 = vpack.c.b16 %v730, %v728
  %v1215 = vpack.c.b16 %v731, %v729
  %v1216 = vpack.c.b16 %v734, %v732
  %v1217 = vpack.c.b16 %v735, %v733
  %v1218 = vpack.c.b16 %v738, %v736
  %v1219 = vpack.c.b16 %v739, %v737
  %v1220 = vpack.c.b16 %v742, %v740
  %v1221 = vpack.c.b16 %v743, %v741
  %v1222 = vpack.c.b16 %v746, %v744
  %v1223 = vpack.c.b16 %v747, %v745
  %v1224 = vpack.c.b16 %v750, %v748
  %v1225 = vpack.c.b16 %v751, %v749
  %v1226 = vpack.c.b16 %v754, %v752
  %v1227 = vpack.c.b16 %v755, %v753
  %v1228 = vpack.c.b16 %v758, %v756
  %v1229 = vpack.c.b16 %v759, %v757
  %v1230 = vpack.c.b16 %v762, %v760
  %v1231 = vpack.c.b16 %v763, %v761
  %v1232 = vpack.c.b16 %v766, %v764
  %v1233 = vpack.c.b16 %v767, %v765
  %v1234 = vpack.c.b16 %v770, %v768
  %v1235 = vpack.c.b16 %v771, %v769
  %v1236 = vpack.c.b16 %v774, %v772
  %v1237 = vpack.c.b16 %v775, %v773
  %v1238 = vpack.c.b16 %v778, %v776
  %v1239 = vpack.c.b16 %v779, %v777
  %v1240 = vpack.c.b16 %v782, %v780
  %v1241 = vpack.c.b16 %v783, %v781
  %v1242 = vpack.c.b16 %v786, %v784
  %v1243 = vpack.c.b16 %v787, %v785
  %v1244 = vpack.c.b16 %v790, %v788
  %v1245 = vpack.c.b16 %v791, %v789
  %v1246 = vpack.c.b16 %v794, %v792
  %v1247 = vpack.c.b16 %v795, %v793
  %v1248 = vpack.c.b16 %v798, %v796
  %v1249 = vpack.c.b16 %v799, %v797
  %v1250 = vpack.c.b16 %v802, %v800
  %v1251 = vpack.c.b16 %v803, %v801
  %v1252 = vpack.c.b16 %v806, %v804
  %v1253 = vpack.c.b16 %v807, %v805
  %v1254 = vpack.c.b16 %v810, %v808
  %v1255 = vpack.c.b16 %v811, %v809
  %v1256 = vpack.c.b16 %v814, %v812
  %v1257 = vpack.c.b16 %v815, %v813
  %v1258 = vpack.c.b16 %v818, %v816
  %v1259 = vpack.c.b16 %v819, %v817
  %v1260 = vpack.c.b16 %v822, %v820
  %v1261 = vpack.c.b16 %v823, %v821
  %v1262 = vpack.c.b16 %v826, %v824
  %v1263 = vpack.c.b16 %v827, %v825
  %v1264 = vpack.c.b16 %v830, %v828
  %v1265 = vpack.c.b16 %v831, %v829
  %v1266 = vpack.c.b16 %v834, %v832
  %v1267 = vpack.c.b16 %v835, %v833
  %v1268 = vpack.c.b16 %v838, %v836
  %v1269 = vpack.c.b16 %v839, %v837
  %v1270 = vpack.c.b16 %v842, %v840
  %v1271 = vpack.c.b16 %v843, %v841
  %v1272 = vpack.c.b16 %v846, %v844
  %v1273 = vpack.c.b16 %v847, %v845
  %v1274 = vpack.c.b16 %v850, %v848
  %v1275 = vpack.c.b16 %v851, %v849
  %v1276 = vpack.c.b16 %v854, %v852
  %v1277 = vpack.c.b16 %v855, %v853
  %v1278 = vpack.c.b16 %v858, %v856
  %v1279 = vpack.c.b16 %v859, %v857
  %v1280 = vpack.c.b16 %v862, %v860
  %v1281 = vpack.c.b16 %v863, %v861
  %v1282 = vpack.c.b16 %v866, %v864
  %v1283 = vpack.c.b16 %v867, %v865
  %v1284 = vpack.c.b16 %v870, %v868
  %v1285 = vpack.c.b16 %v871, %v869
  %v1286 = vpack.c.b16 %v874, %v872
  %v1287 = vpack.c.b16 %v875, %v873
  %v1288 = vpack.c.b16 %v878, %v876
  %v1289 = vpack.c.b16 %v879, %v877
  %v1290 = vpack.c.b16 %v882, %v880
  %v1291 = vpack.c.b16 %v883, %v881
  %v1292 = vpack.c.b16 %v886, %v884
  %v1293 = vpack.c.b16 %v887, %v885
  %v1294 = vpack.c.b16 %v890, %v888
  %v1295 = vpack.c.b16 %v891, %v889
  %v1296 = vpack.c.b16 %v894, %v892
  %v1297 = vpack.c.b16 %v895, %v893
  %v1298 = vpack.c.b16 %v898, %v896
  %v1299 = vpack.c.b16 %v899, %v897
  %v1300 = vpack.c.b16 %v902, %v900
  %v1301 = vpack.c.b16 %v903, %v901
  %v1302 = vpack.c.b16 %v906, %v904
  %v1303 = vpack.c.b16 %v907, %v905
  %v1304 = vpack.c.b16 %v910, %v908
  %v1305 = vpack.c.b16 %v911, %v909
  %v1306 = vpack.c.b16 %v914, %v912
  %v1307 = vpack.c.b16 %v915, %v913
  %v1308 = vpack.c.b16 %v918, %v916
  %v1309 = vpack.c.b16 %v919, %v917
  %v1310 = vpack.c.b16 %v922, %v920
  %v1311 = vpack.c.b16 %v923, %v921
  %v1312 = vpack.c.b16 %v926, %v924
  %v1313 = vpack.c.b16 %v927, %v925
  %v1314 = vpack.c.b16 %v930, %v928
  %v1315 = vpack.c.b16 %v931, %v929
  %v1316 = vpack.c.b16 %v934, %v932
  %v1317 = vpack.c.b16 %v935, %v933
  %v1318 = vpack.c.b16 %v938, %v936
  %v1319 = vpack.c.b16 %v939, %v937
  %v1320 = vpack.c.b16 %v942, %v940
  %v1321 = vpack.c.b16 %v943, %v941
  %v1322 = vpack.c.b16 %v946, %v944
  %v1323 = vpack.c.b16 %v947, %v945
  %v1324 = vpack.c.b16 %v950, %v948
  %v1325 = vpack.c.b16 %v951, %v949
  %v1326 = vpack.c.b16 %v954, %v952
  %v1327 = vpack.c.b16 %v955, %v953
  %v1328 = vpack.c.b16 %v958, %v956
  %v1329 = vpack.c.b16 %v959, %v957
  %v1330 = vpack.c.b16 %v962, %v960
  %v1331 = vpack.c.b16 %v963, %v961
  %v1332 = vpack.c.b16 %v966, %v964
  %v1333 = vpack.c.b16 %v967, %v965
  %v1334 = vpack.c.b16 %v970, %v968
  %v1335 = vpack.c.b16 %v971, %v969
  %v1336 = vpack.c.b16 %v974, %v972
  %v1337 = vpack.c.b16 %v975, %v973
  %v1338 = vpack.c.b16 %v978, %v976
  %v1339 = vpack.c.b16 %v979, %v977
  %v1340 = vpack.c.b16 %v982, %v980
  %v1341 = vpack.c.b16 %v983, %v981
  %v1342 = vpack.c.b16 %v986, %v984
  %v1343 = vpack.c.b16 %v987, %v985
  %v1344 = vpack.c.b16 %v990, %v988
  %v1345 = vpack.c.b16 %v991, %v989
  %v1346 = vpack.c.b16 %v994, %v992
  %v1347 = vpack.c.b16 %v995, %v993
  %v1348 = vpack.c.b16 %v998, %v996
  %v1349 = vpack.c.b16 %v999, %v997
  %v1350 = vpack.c.b16 %v1002, %v1000
  %v1351 = vpack.c.b16 %v1003, %v1001
  %v1352 = vpack.c.b16 %v1006, %v1004
  %v1353 = vpack.c.b16 %v1007, %v1005
  %v1354 = vpack.c.b16 %v1010, %v1008
  %v1355 = vpack.c.b16 %v1011, %v1009
  %v1356 = vpack.c.b16 %v1014, %v1012
  %v1357 = vpack.c.b16 %v1015, %v1013
  %v1358 = vpack.c.b16 %v1018, %v1016
  %v1359 = vpack.c.b16 %v1019, %v1017
  %v1360 = vpack.c.b16 %v1022, %v1020
  %v1361 = vpack.c.b16 %v1023, %v1021
  %v1362 = vpack.c.b16 %v1026, %v1024
  %v1363 = vpack.c.b16 %v1027, %v1025
  %v1364 = vpack.c.b16 %v1030, %v1028
  %v1365 = vpack.c.b16 %v1031, %v1029
  %v1366 = vpack.c.b16 %v1034, %v1032
  %v1367 = vpack.c.b16 %v1035, %v1033
  %v1368 = vpack.c.b16 %v1038, %v1036
  %v1369 = vpack.c.b16 %v1039, %v1037
  %v1370 = vpack.c.b16 %v1042, %v1040
  %v1371 = vpack.c.b16 %v1043, %v1041
  %v1372 = vpack.c.b16 %v1046, %v1044
  %v1373 = vpack.c.b16 %v1047, %v1045
  %v1374 = vpack.c.b16 %v1050, %v1048
  %v1375 = vpack.c.b16 %v1051, %v1049
  %v1376 = vpack.c.b16 %v1054, %v1052
  %v1377 = vpack.c.b16 %v1055, %v1053
  %v1378 = vpack.c.b16 %v1058, %v1056
  %v1379 = vpack.c.b16 %v1059, %v1057
  %v1380 = vpack.c.b16 %v1062, %v1060
  %v1381 = vpack.c.b16 %v1063, %v1061
  %v1382 = vpack.c.b16 %v1066, %v1064
  %v1383 = vpack.c.b16 %v1067, %v1065
  %v1384 = vpack.c.b16 %v1070, %v1068
  %v1385 = vpack.c.b16 %v1071, %v1069
  %v1386 = vpack.c.b16 %v1074, %v1072
  %v1387 = vpack.c.b16 %v1075, %v1073
  %v1388 = vpack.c.b16 %v1078, %v1076
  %v1389 = vpack.c.b16 %v1079, %v1077
  %v1390 = vpack.c.b16 %v1082, %v1080
  %v1391 = vpack.c.b16 %v1083, %v1081
  %v1392 = vpack.c.b16 %v1086, %v1084
  %v1393 = vpack.c.b16 %v1087, %v1085
  %v1394 = vpack.c.b16 %v1090, %v1088
  %v1395 = vpack.c.b16 %v1091, %v1089
  %v1396 = vpack.c.b16 %v1094, %v1092
  %v1397 = vpack.c.b16 %v1095, %v1093
  %v1398 = vpack.c.b16 %v1098, %v1096
  %v1399 = vpack.c.b16 %v1099, %v1097
  %v1400 = vpack.c.b16 %v1102, %v1100
  %v1401 = vpack.c.b16 %v1103, %v1101
  %v1402 = vpack.c.b16 %v1106, %v1104
  %v1403 = vpack.c.b16 %v1107, %v1105
  %v1404 = vpack.c.b16 %v1110, %v1108
  %v1405 = vpack.c.b16 %v1111, %v1109
  %v1406 = vpack.c.b16 %v1114, %v1112
  %v1407 = vpack.c.b16 %v1115, %v1113
  %v1408 = vpack.c.b16 %v1118, %v1116
  %v1409 = vpack.c.b16 %v1119, %v1117
  %v1410 = vpack.c.b16 %v1122, %v1120
  %v1411 = vpack.c.b16 %v1123, %v1121
  %v1412 = vpack.c.b16 %v1126, %v1124
  %v1413 = vpack.c.b16 %v1127, %v1125
  %v1414 = vpack.c.b16 %v1130, %v1128
  %v1415 = vpack.c.b16 %v1131, %v1129
  %v1416 = vpack.c.b16 %v1134, %v1132
  %v1417 = vpack.c.b16 %v1135, %v1133
  %v1418 = vpack.c.b16 %v1138, %v1136
  %v1419 = vpack.c.b16 %v1139, %v1137
  %v1420 = vpack.c.b16 %v1142, %v1140
  %v1421 = vpack.c.b16 %v1143, %v1141
  %v1422 = vpack.c.b16 %v1146, %v1144
  %v1423 = vpack.c.b16 %v1147, %v1145
  %v1424 = vpack.c.b16 %v1150, %v1148
  %v1425 = vpack.c.b16 %v1151, %v1149
  %v1426 = vpack.c.b16 %v1154, %v1152
  %v1427 = vpack.c.b16 %v1155, %v1153
  %v1428 = vpack.c.b16 %v1158, %v1156
  %v1429 = vpack.c.b16 %v1159, %v1157
  %v1430 = vpack.c.b16 %v1162, %v1160
  %v1431 = vpack.c.b16 %v1163, %v1161
  %v1432 = vpack.c.b16 %v1166, %v1164
  %v1433 = vpack.c.b16 %v1167, %v1165
  %v1434 = vpack.c.b16 %v1170, %v1168
  %v1435 = vpack.c.b16 %v1171, %v1169
  %v1436 = vpack.c.b16 %v1174, %v1172
  %v1437 = vpack.c.b16 %v1175, %v1173
  %v1438 = vpack.c.b16 %v1178, %v1176
  %v1439 = vpack.c.b16 %v1179, %v1177
  %v1440 = vpack.c.b16 %v1182, %v1180
  %v1441 = vpack.c.b16 %v1183, %v1181
  %v1442 = vpack.c.b16 %v1186, %v1184
  %v1443 = vpack.c.b16 %v1187, %v1185
  %1700 = vmatprep.subr.bf16.mxu0 %v1189
  %1701 = vmatpush1.bf16.msra.mxu0 %v1188
  %1702 = vmatprep.subr.bf16.mxu0 %v1191
  %1703 = vmatpush1.bf16.msra.mxu0 %v1190
  %1704 = vmatprep.subr.bf16.mxu0 %v1193
  %1705 = vmatpush1.bf16.msra.mxu0 %v1192
  %1706 = vmatprep.subr.bf16.mxu0 %v1195
  %1707 = vmatpush1.bf16.msra.mxu0 %v1194
  %1708 = vmatprep.subr.bf16.mxu0 %v1197
  %1709 = vmatpush1.bf16.msra.mxu0 %v1196
  %1710 = vmatprep.subr.bf16.mxu0 %v1199
  %1711 = vmatpush1.bf16.msra.mxu0 %v1198
  %1712 = vmatprep.subr.bf16.mxu0 %v1201
  %1713 = vmatpush1.bf16.msra.mxu0 %v1200
  %1714 = vmatprep.subr.bf16.mxu0 %v1203
  %1715 = vmatpush1.bf16.msra.mxu0 %v1202
  %1716 = vmatprep.subr.bf16.mxu0 %v1205
  %1717 = vmatpush1.bf16.msra.mxu0 %v1204
  %1718 = vmatprep.subr.bf16.mxu0 %v1207
  %1719 = vmatpush1.bf16.msra.mxu0 %v1206
  %1720 = vmatprep.subr.bf16.mxu0 %v1209
  %1721 = vmatpush1.bf16.msra.mxu0 %v1208
  %1722 = vmatprep.subr.bf16.mxu0 %v1211
  %1723 = vmatpush1.bf16.msra.mxu0 %v1210
  %1724 = vmatprep.subr.bf16.mxu0 %v1213
  %1725 = vmatpush1.bf16.msra.mxu0 %v1212
  %1726 = vmatprep.subr.bf16.mxu0 %v1215
  %1727 = vmatpush1.bf16.msra.mxu0 %v1214
  %1728 = vmatprep.subr.bf16.mxu0 %v1217
  %1729 = vmatpush1.bf16.msra.mxu0 %v1216
  %1730 = vmatprep.subr.bf16.mxu0 %v1219
  %1731 = vmatpush1.bf16.msra.mxu0 %v1218
  %1732 = vmatprep.mubr.bf16.mxu0 %v343
  %1733 = vmatmul.mubr.bf16.gmra.mrb[0].mxu0 %v329
  %v1734 = vpop.f32.mrb[0].mxu0
  %v1735 = vadd.f32 %v297, %v1734
  %v1736 = vpop.f32.mrb[0].mxu0
  %v1737 = vadd.f32 %v301, %v1736
  %v1738 = vpop.f32.mrb[0].mxu0
  %v1739 = vpop.f32.mrb[0].mxu0
  %1740 = vdwg.mxu0
  %1741 = vmatprep.subr.bf16.mxu0 %v1221
  %1742 = vmatpush1.bf16.msra.mxu0 %v1220
  %1743 = vmatprep.subr.bf16.mxu0 %v1223
  %1744 = vmatpush1.bf16.msra.mxu0 %v1222
  %1745 = vmatprep.subr.bf16.mxu0 %v1225
  %1746 = vmatpush1.bf16.msra.mxu0 %v1224
  %1747 = vmatprep.subr.bf16.mxu0 %v1227
  %1748 = vmatpush1.bf16.msra.mxu0 %v1226
  %1749 = vmatprep.subr.bf16.mxu0 %v1229
  %1750 = vmatpush1.bf16.msra.mxu0 %v1228
  %1751 = vmatprep.subr.bf16.mxu0 %v1231
  %1752 = vmatpush1.bf16.msra.mxu0 %v1230
  %1753 = vmatprep.subr.bf16.mxu0 %v1233
  %1754 = vmatpush1.bf16.msra.mxu0 %v1232
  %1755 = vmatprep.subr.bf16.mxu0 %v1235
  %1756 = vmatpush1.bf16.msra.mxu0 %v1234
  %1757 = vmatprep.subr.bf16.mxu0 %v1237
  %1758 = vmatpush1.bf16.msra.mxu0 %v1236
  %1759 = vmatprep.subr.bf16.mxu0 %v1239
  %1760 = vmatpush1.bf16.msra.mxu0 %v1238
  %1761 = vmatprep.subr.bf16.mxu0 %v1241
  %1762 = vmatpush1.bf16.msra.mxu0 %v1240
  %1763 = vmatprep.subr.bf16.mxu0 %v1243
  %1764 = vmatpush1.bf16.msra.mxu0 %v1242
  %1765 = vmatprep.subr.bf16.mxu0 %v1245
  %1766 = vmatpush1.bf16.msra.mxu0 %v1244
  %1767 = vmatprep.subr.bf16.mxu0 %v1247
  %1768 = vmatpush1.bf16.msra.mxu0 %v1246
  %1769 = vmatprep.subr.bf16.mxu0 %v1249
  %1770 = vmatpush1.bf16.msra.mxu0 %v1248
  %1771 = vmatprep.subr.bf16.mxu0 %v1251
  %1772 = vmatpush1.bf16.msra.mxu0 %v1250
  %1773 = vmatprep.mubr.bf16.mxu0 %v353
  %1774 = vmatmul.mubr.bf16.gmra.mrb[0].mxu0 %v351
  %v1775 = vpop.f32.mrb[0].mxu0
  %v1776 = vadd.f32 %v1735, %v1775
  %v1777 = vpop.f32.mrb[0].mxu0
  %v1778 = vadd.f32 %v1737, %v1777
  %v1779 = vpop.f32.mrb[0].mxu0
  %v1780 = vpop.f32.mrb[0].mxu0
  %1781 = vdwg.mxu0
  %1782 = vmatprep.subr.bf16.mxu0 %v1253
  %1783 = vmatpush1.bf16.msra.mxu0 %v1252
  %1784 = vmatprep.subr.bf16.mxu0 %v1255
  %1785 = vmatpush1.bf16.msra.mxu0 %v1254
  %1786 = vmatprep.subr.bf16.mxu0 %v1257
  %1787 = vmatpush1.bf16.msra.mxu0 %v1256
  %1788 = vmatprep.subr.bf16.mxu0 %v1259
  %1789 = vmatpush1.bf16.msra.mxu0 %v1258
  %1790 = vmatprep.subr.bf16.mxu0 %v1261
  %1791 = vmatpush1.bf16.msra.mxu0 %v1260
  %1792 = vmatprep.subr.bf16.mxu0 %v1263
  %1793 = vmatpush1.bf16.msra.mxu0 %v1262
  %1794 = vmatprep.subr.bf16.mxu0 %v1265
  %1795 = vmatpush1.bf16.msra.mxu0 %v1264
  %1796 = vmatprep.subr.bf16.mxu0 %v1267
  %1797 = vmatpush1.bf16.msra.mxu0 %v1266
  %1798 = vmatprep.subr.bf16.mxu0 %v1269
  %1799 = vmatpush1.bf16.msra.mxu0 %v1268
  %1800 = vmatprep.subr.bf16.mxu0 %v1271
  %1801 = vmatpush1.bf16.msra.mxu0 %v1270
  %1802 = vmatprep.subr.bf16.mxu0 %v1273
  %1803 = vmatpush1.bf16.msra.mxu0 %v1272
  %1804 = vmatprep.subr.bf16.mxu0 %v1275
  %1805 = vmatpush1.bf16.msra.mxu0 %v1274
  %1806 = vmatprep.subr.bf16.mxu0 %v1277
  %1807 = vmatpush1.bf16.msra.mxu0 %v1276
  %1808 = vmatprep.subr.bf16.mxu0 %v1279
  %1809 = vmatpush1.bf16.msra.mxu0 %v1278
  %1810 = vmatprep.subr.bf16.mxu0 %v1281
  %1811 = vmatpush1.bf16.msra.mxu0 %v1280
  %1812 = vmatprep.subr.bf16.mxu0 %v1283
  %1813 = vmatpush1.bf16.msra.mxu0 %v1282
  %1814 = vmatprep.mubr.bf16.mxu0 %v350
  %1815 = vmatmul.mubr.bf16.gmra.mrb[0].mxu0 %v336
  %v1816 = vpop.f32.mrb[0].mxu0
  %v1817 = vadd.f32 %v1776, %v1816
  %v1818 = vpop.f32.mrb[0].mxu0
  %v1819 = vadd.f32 %v1778, %v1818
  %v1820 = vpop.f32.mrb[0].mxu0
  %v1821 = vpop.f32.mrb[0].mxu0
  %1822 = vdwg.mxu0
  %1823 = vmatprep.subr.bf16.mxu0 %v1285
  %1824 = vmatpush1.bf16.msra.mxu0 %v1284
  %1825 = vmatprep.subr.bf16.mxu0 %v1287
  %1826 = vmatpush1.bf16.msra.mxu0 %v1286
  %1827 = vmatprep.subr.bf16.mxu0 %v1289
  %1828 = vmatpush1.bf16.msra.mxu0 %v1288
  %1829 = vmatprep.subr.bf16.mxu0 %v1291
  %1830 = vmatpush1.bf16.msra.mxu0 %v1290
  %1831 = vmatprep.subr.bf16.mxu0 %v1293
  %1832 = vmatpush1.bf16.msra.mxu0 %v1292
  %1833 = vmatprep.subr.bf16.mxu0 %v1295
  %1834 = vmatpush1.bf16.msra.mxu0 %v1294
  %1835 = vmatprep.subr.bf16.mxu0 %v1297
  %1836 = vmatpush1.bf16.msra.mxu0 %v1296
  %1837 = vmatprep.subr.bf16.mxu0 %v1299
  %1838 = vmatpush1.bf16.msra.mxu0 %v1298
  %1839 = vmatprep.subr.bf16.mxu0 %v1301
  %1840 = vmatpush1.bf16.msra.mxu0 %v1300
  %1841 = vmatprep.subr.bf16.mxu0 %v1303
  %1842 = vmatpush1.bf16.msra.mxu0 %v1302
  %1843 = vmatprep.subr.bf16.mxu0 %v1305
  %1844 = vmatpush1.bf16.msra.mxu0 %v1304
  %1845 = vmatprep.subr.bf16.mxu0 %v1307
  %1846 = vmatpush1.bf16.msra.mxu0 %v1306
  %1847 = vmatprep.subr.bf16.mxu0 %v1309
  %1848 = vmatpush1.bf16.msra.mxu0 %v1308
  %1849 = vmatprep.subr.bf16.mxu0 %v1311
  %1850 = vmatpush1.bf16.msra.mxu0 %v1310
  %1851 = vmatprep.subr.bf16.mxu0 %v1313
  %1852 = vmatpush1.bf16.msra.mxu0 %v1312
  %1853 = vmatprep.subr.bf16.mxu0 %v1315
  %1854 = vmatpush1.bf16.msra.mxu0 %v1314
  %1855 = vmatprep.mubr.bf16.mxu0 %v354
  %1856 = vmatmul.mubr.bf16.gmra.mrb[0].mxu0 %v352
  %v1857 = vpop.f32.mrb[0].mxu0
  %v1858 = vadd.f32 %v1817, %v1857
  %v1859 = vpop.f32.mrb[0].mxu0
  %v1860 = vadd.f32 %v1819, %v1859
  %v1861 = vpop.f32.mrb[0].mxu0
  %v1862 = vpop.f32.mrb[0].mxu0
  %1863 = vdwg.mxu0
  %1864 = vmatprep.subr.bf16.mxu0 %v1317
  %1865 = vmatpush1.bf16.msra.mxu0 %v1316
  %1866 = vmatprep.subr.bf16.mxu0 %v1319
  %1867 = vmatpush1.bf16.msra.mxu0 %v1318
  %1868 = vmatprep.subr.bf16.mxu0 %v1321
  %1869 = vmatpush1.bf16.msra.mxu0 %v1320
  %1870 = vmatprep.subr.bf16.mxu0 %v1323
  %1871 = vmatpush1.bf16.msra.mxu0 %v1322
  %1872 = vmatprep.subr.bf16.mxu0 %v1325
  %1873 = vmatpush1.bf16.msra.mxu0 %v1324
  %1874 = vmatprep.subr.bf16.mxu0 %v1327
  %1875 = vmatpush1.bf16.msra.mxu0 %v1326
  %1876 = vmatprep.subr.bf16.mxu0 %v1329
  %1877 = vmatpush1.bf16.msra.mxu0 %v1328
  %1878 = vmatprep.subr.bf16.mxu0 %v1331
  %1879 = vmatpush1.bf16.msra.mxu0 %v1330
  %1880 = vmatprep.subr.bf16.mxu0 %v1333
  %1881 = vmatpush1.bf16.msra.mxu0 %v1332
  %1882 = vmatprep.subr.bf16.mxu0 %v1335
  %1883 = vmatpush1.bf16.msra.mxu0 %v1334
  %1884 = vmatprep.subr.bf16.mxu0 %v1337
  %1885 = vmatpush1.bf16.msra.mxu0 %v1336
  %1886 = vmatprep.subr.bf16.mxu0 %v1339
  %1887 = vmatpush1.bf16.msra.mxu0 %v1338
  %1888 = vmatprep.subr.bf16.mxu0 %v1341
  %1889 = vmatpush1.bf16.msra.mxu0 %v1340
  %1890 = vmatprep.subr.bf16.mxu0 %v1343
  %1891 = vmatpush1.bf16.msra.mxu0 %v1342
  %1892 = vmatprep.subr.bf16.mxu0 %v1345
  %1893 = vmatpush1.bf16.msra.mxu0 %v1344
  %1894 = vmatprep.subr.bf16.mxu0 %v1347
  %1895 = vmatpush1.bf16.msra.mxu0 %v1346
  %1896 = vmatprep.mubr.bf16.mxu0 %v392
  %1897 = vmatmul.mubr.bf16.gmra.mrb[0].mxu0 %v378
  %v1898 = vpop.f32.mrb[0].mxu0
  %v1899 = vadd.f32 %v1858, %v1898
  %v1900 = vpop.f32.mrb[0].mxu0
  %v1901 = vadd.f32 %v1860, %v1900
  %v1902 = vpop.f32.mrb[0].mxu0
  %v1903 = vpop.f32.mrb[0].mxu0
  %1904 = vdwg.mxu0
  %1905 = vmatprep.subr.bf16.mxu0 %v1349
  %1906 = vmatpush1.bf16.msra.mxu0 %v1348
  %1907 = vmatprep.subr.bf16.mxu0 %v1351
  %1908 = vmatpush1.bf16.msra.mxu0 %v1350
  %1909 = vmatprep.subr.bf16.mxu0 %v1353
  %1910 = vmatpush1.bf16.msra.mxu0 %v1352
  %1911 = vmatprep.subr.bf16.mxu0 %v1355
  %1912 = vmatpush1.bf16.msra.mxu0 %v1354
  %1913 = vmatprep.subr.bf16.mxu0 %v1357
  %1914 = vmatpush1.bf16.msra.mxu0 %v1356
  %1915 = vmatprep.subr.bf16.mxu0 %v1359
  %1916 = vmatpush1.bf16.msra.mxu0 %v1358
  %1917 = vmatprep.subr.bf16.mxu0 %v1361
  %1918 = vmatpush1.bf16.msra.mxu0 %v1360
  %1919 = vmatprep.subr.bf16.mxu0 %v1363
  %1920 = vmatpush1.bf16.msra.mxu0 %v1362
  %1921 = vmatprep.subr.bf16.mxu0 %v1365
  %1922 = vmatpush1.bf16.msra.mxu0 %v1364
  %1923 = vmatprep.subr.bf16.mxu0 %v1367
  %1924 = vmatpush1.bf16.msra.mxu0 %v1366
  %1925 = vmatprep.subr.bf16.mxu0 %v1369
  %1926 = vmatpush1.bf16.msra.mxu0 %v1368
  %1927 = vmatprep.subr.bf16.mxu0 %v1371
  %1928 = vmatpush1.bf16.msra.mxu0 %v1370
  %1929 = vmatprep.subr.bf16.mxu0 %v1373
  %1930 = vmatpush1.bf16.msra.mxu0 %v1372
  %1931 = vmatprep.subr.bf16.mxu0 %v1375
  %1932 = vmatpush1.bf16.msra.mxu0 %v1374
  %1933 = vmatprep.subr.bf16.mxu0 %v1377
  %1934 = vmatpush1.bf16.msra.mxu0 %v1376
  %1935 = vmatprep.subr.bf16.mxu0 %v1379
  %1936 = vmatpush1.bf16.msra.mxu0 %v1378
  %1937 = vmatprep.mubr.bf16.mxu0 %v402
  %1938 = vmatmul.mubr.bf16.gmra.mrb[0].mxu0 %v400
  %v1939 = vpop.f32.mrb[0].mxu0
  %v1940 = vadd.f32 %v1899, %v1939
  %v1941 = vpop.f32.mrb[0].mxu0
  %v1942 = vadd.f32 %v1901, %v1941
  %v1943 = vpop.f32.mrb[0].mxu0
  %v1944 = vpop.f32.mrb[0].mxu0
  %1945 = vdwg.mxu0
  %1946 = vmatprep.subr.bf16.mxu0 %v1381
  %1947 = vmatpush1.bf16.msra.mxu0 %v1380
  %1948 = vmatprep.subr.bf16.mxu0 %v1383
  %1949 = vmatpush1.bf16.msra.mxu0 %v1382
  %1950 = vmatprep.subr.bf16.mxu0 %v1385
  %1951 = vmatpush1.bf16.msra.mxu0 %v1384
  %1952 = vmatprep.subr.bf16.mxu0 %v1387
  %1953 = vmatpush1.bf16.msra.mxu0 %v1386
  %1954 = vmatprep.subr.bf16.mxu0 %v1389
  %1955 = vmatpush1.bf16.msra.mxu0 %v1388
  %1956 = vmatprep.subr.bf16.mxu0 %v1391
  %1957 = vmatpush1.bf16.msra.mxu0 %v1390
  %1958 = vmatprep.subr.bf16.mxu0 %v1393
  %1959 = vmatpush1.bf16.msra.mxu0 %v1392
  %1960 = vmatprep.subr.bf16.mxu0 %v1395
  %1961 = vmatpush1.bf16.msra.mxu0 %v1394
  %1962 = vmatprep.subr.bf16.mxu0 %v1397
  %1963 = vmatpush1.bf16.msra.mxu0 %v1396
  %1964 = vmatprep.subr.bf16.mxu0 %v1399
  %1965 = vmatpush1.bf16.msra.mxu0 %v1398
  %1966 = vmatprep.subr.bf16.mxu0 %v1401
  %1967 = vmatpush1.bf16.msra.mxu0 %v1400
  %1968 = vmatprep.subr.bf16.mxu0 %v1403
  %1969 = vmatpush1.bf16.msra.mxu0 %v1402
  %1970 = vmatprep.subr.bf16.mxu0 %v1405
  %1971 = vmatpush1.bf16.msra.mxu0 %v1404
  %1972 = vmatprep.subr.bf16.mxu0 %v1407
  %1973 = vmatpush1.bf16.msra.mxu0 %v1406
  %1974 = vmatprep.subr.bf16.mxu0 %v1409
  %1975 = vmatpush1.bf16.msra.mxu0 %v1408
  %1976 = vmatprep.subr.bf16.mxu0 %v1411
  %1977 = vmatpush1.bf16.msra.mxu0 %v1410
  %1978 = vmatprep.mubr.bf16.mxu0 %v399
  %1979 = vmatmul.mubr.bf16.gmra.mrb[0].mxu0 %v385
  %v1980 = vpop.f32.mrb[0].mxu0
  %v1981 = vadd.f32 %v1940, %v1980
  %v1982 = vpop.f32.mrb[0].mxu0
  %v1983 = vadd.f32 %v1942, %v1982
  %v1984 = vpop.f32.mrb[0].mxu0
  %v1985 = vpop.f32.mrb[0].mxu0
  %1986 = vdwg.mxu0
  %1987 = vmatprep.subr.bf16.mxu0 %v1413
  %1988 = vmatpush1.bf16.msra.mxu0 %v1412
  %1989 = vmatprep.subr.bf16.mxu0 %v1415
  %1990 = vmatpush1.bf16.msra.mxu0 %v1414
  %1991 = vmatprep.subr.bf16.mxu0 %v1417
  %1992 = vmatpush1.bf16.msra.mxu0 %v1416
  %1993 = vmatprep.subr.bf16.mxu0 %v1419
  %1994 = vmatpush1.bf16.msra.mxu0 %v1418
  %1995 = vmatprep.subr.bf16.mxu0 %v1421
  %1996 = vmatpush1.bf16.msra.mxu0 %v1420
  %1997 = vmatprep.subr.bf16.mxu0 %v1423
  %1998 = vmatpush1.bf16.msra.mxu0 %v1422
  %1999 = vmatprep.subr.bf16.mxu0 %v1425
  %2000 = vmatpush1.bf16.msra.mxu0 %v1424
  %2001 = vmatprep.subr.bf16.mxu0 %v1427
  %2002 = vmatpush1.bf16.msra.mxu0 %v1426
  %2003 = vmatprep.subr.bf16.mxu0 %v1429
  %2004 = vmatpush1.bf16.msra.mxu0 %v1428
  %2005 = vmatprep.subr.bf16.mxu0 %v1431
  %2006 = vmatpush1.bf16.msra.mxu0 %v1430
  %2007 = vmatprep.subr.bf16.mxu0 %v1433
  %2008 = vmatpush1.bf16.msra.mxu0 %v1432
  %2009 = vmatprep.subr.bf16.mxu0 %v1435
  %2010 = vmatpush1.bf16.msra.mxu0 %v1434
  %2011 = vmatprep.subr.bf16.mxu0 %v1437
  %2012 = vmatpush1.bf16.msra.mxu0 %v1436
  %2013 = vmatprep.subr.bf16.mxu0 %v1439
  %2014 = vmatpush1.bf16.msra.mxu0 %v1438
  %2015 = vmatprep.subr.bf16.mxu0 %v1441
  %2016 = vmatpush1.bf16.msra.mxu0 %v1440
  %2017 = vmatprep.subr.bf16.mxu0 %v1443
  %2018 = vmatpush1.bf16.msra.mxu0 %v1442
  %2019 = vmatprep.mubr.bf16.mxu0 %v403
  %2020 = vmatmul.mubr.bf16.gmra.mrb[0].mxu0 %v401
  %v2021 = vpop.f32.mrb[0].mxu0
  %v2022 = vadd.f32 %v1981, %v2021
  %v2023 = vpop.f32.mrb[0].mxu0
  %v2024 = vadd.f32 %v1983, %v2023
  %v2025 = vpop.f32.mrb[0].mxu0
  %v2026 = vpop.f32.mrb[0].mxu0
  %2027 = vdwg.mxu0
  %v2028 = vmax.f32 %v2022, 0.0
  %v2029 = vmax.f32 %v2024, 0.0
  %v2030 = vpack.c.bf16 %v2028, %v2028
  %v2031 = vpack.c.bf16 %v2029, %v2029
  %v2032 = vld [vmem:[%s5] sm:$0xf]
  %v2033 = vld [vmem:[%s5 + $0x4] sm:$0xf]
  %v2034 = vld [vmem:[%s5 + $0x8] sm:$0xf]
  %v2035 = vld [vmem:[%s5 + $0xc] sm:$0xf]
  %v2036 = vld [vmem:[%s5 + $0x10] sm:$0xf]
  %v2037 = vld [vmem:[%s5 + $0x14] sm:$0xf]
  %v2038 = vld [vmem:[%s5 + $0x18] sm:$0xf]
  %v2039 = vld [vmem:[%s5 + $0x1c] sm:$0xf]
  %v2040 = vld [vmem:[%s5 + $0x20] sm:$0xf]
  %v2041 = vld [vmem:[%s5 + $0x24] sm:$0xf]
  %v2042 = vld [vmem:[%s5 + $0x28] sm:$0xf]
  %v2043 = vld [vmem:[%s5 + $0x2c] sm:$0xf]
  %v2044 = vld [vmem:[%s5 + $0x30] sm:$0xf]
  %v2045 = vld [vmem:[%s5 + $0x34] sm:$0xf]
  %v2046 = vld [vmem:[%s5 + $0x38] sm:$0xf]
  %v2047 = vld [vmem:[%s5 + $0x3c] sm:$0xf]
  %v2048 = vld [vmem:[%s5 + $0x40] sm:$0xf]
  %v2049 = vld [vmem:[%s5 + $0x44] sm:$0xf]
  %v2050 = vld [vmem:[%s5 + $0x48] sm:$0xf]
  %v2051 = vld [vmem:[%s5 + $0x4c] sm:$0xf]
  %v2052 = vld [vmem:[%s5 + $0x50] sm:$0xf]
  %v2053 = vld [vmem:[%s5 + $0x54] sm:$0xf]
  %v2054 = vld [vmem:[%s5 + $0x58] sm:$0xf]
  %v2055 = vld [vmem:[%s5 + $0x5c] sm:$0xf]
  %v2056 = vld [vmem:[%s6] sm:$0x1]
  %v2058 = vlaneseq
  %v2059 = vshrl.u32 %v2058, 7
  %v2060 = vsub.s32 0, %v2059
  %v2061 = vrot.slane %v2056, %v2060
  %v2087 = vunpack.c.l.b16 %v2032
  %v2088 = vunpack.c.l.b16 %v2033
  %v2089 = vunpack.c.l.b16 %v2034
  %v2090 = vunpack.c.l.b16 %v2035
  %v2091 = vunpack.c.l.b16 %v2036
  %v2092 = vunpack.c.l.b16 %v2037
  %v2093 = vunpack.c.l.b16 %v2038
  %v2094 = vunpack.c.l.b16 %v2039
  %v2095 = vunpack.c.l.b16 %v2040
  %v2096 = vunpack.c.l.b16 %v2041
  %v2097 = vunpack.c.l.b16 %v2042
  %v2098 = vunpack.c.l.b16 %v2043
  %v2099 = vunpack.c.l.b16 %v2044
  %v2100 = vunpack.c.l.b16 %v2045
  %v2101 = vunpack.c.l.b16 %v2046
  %v2102 = vunpack.c.l.b16 %v2047
  %v2103 = vunpack.c.l.b16 %v2048
  %v2104 = vunpack.c.l.b16 %v2049
  %v2105 = vunpack.c.l.b16 %v2050
  %v2106 = vunpack.c.l.b16 %v2051
  %v2107 = vunpack.c.l.b16 %v2052
  %v2108 = vunpack.c.l.b16 %v2053
  %v2109 = vunpack.c.l.b16 %v2054
  %v2110 = vunpack.c.l.b16 %v2055
  %v2111 = vpack.c.b16 %v2088, %v2087
  %v2112 = vpack.c.b16 %v2090, %v2089
  %v2113 = vpack.c.b16 %v2092, %v2091
  %v2114 = vpack.c.b16 %v2094, %v2093
  %v2115 = vpack.c.b16 %v2096, %v2095
  %v2116 = vpack.c.b16 %v2098, %v2097
  %v2117 = vpack.c.b16 %v2100, %v2099
  %v2118 = vpack.c.b16 %v2102, %v2101
  %v2119 = vpack.c.b16 %v2104, %v2103
  %v2120 = vpack.c.b16 %v2106, %v2105
  %v2121 = vpack.c.b16 %v2108, %v2107
  %v2122 = vpack.c.b16 %v2110, %v2109
  %vm2135 = vcmask 523264
  %v2137 = vsel %vm2135, %v2031, 0
  %2139 = vmatprep.subr.bf16.mxu0 0
  %2140 = vmatpush1.bf16.msra.mxu0 %v2111
  %2141 = vmatprep.subr.bf16.mxu0 0
  %2142 = vmatpush1.bf16.msra.mxu0 %v2112
  %2143 = vmatprep.subr.bf16.mxu0 0
  %2144 = vmatpush1.bf16.msra.mxu0 %v2113
  %2145 = vmatprep.subr.bf16.mxu0 0
  %2146 = vmatpush1.bf16.msra.mxu0 %v2114
  %2147 = vmatprep.subr.bf16.mxu0 0
  %2148 = vmatpush1.bf16.msra.mxu0 %v2115
  %2149 = vmatprep.subr.bf16.mxu0 0
  %2150 = vmatpush1.bf16.msra.mxu0 %v2116
  %2151 = vmatprep.subr.bf16.mxu0 0
  %2152 = vmatpush1.bf16.msra.mxu0 %v2117
  %2153 = vmatprep.subr.bf16.mxu0 0
  %2154 = vmatpush1.bf16.msra.mxu0 %v2118
  %2155 = vmatprep.subr.bf16.mxu0 0
  %2156 = vmatpush1.bf16.msra.mxu0 %v2119
  %2157 = vmatprep.subr.bf16.mxu0 0
  %2158 = vmatpush1.bf16.msra.mxu0 %v2120
  %2159 = vmatprep.subr.bf16.mxu0 0
  %2160 = vmatpush1.bf16.msra.mxu0 %v2121
  %2161 = vmatprep.subr.bf16.mxu0 0
  %2162 = vmatpush1.bf16.msra.mxu0 %v2122
  %2163 = vmatprep.subr.bf16.mxu0 0
  %2164 = vmatpush1.bf16.msra.mxu0 0
  %2165 = vmatprep.subr.bf16.mxu0 0
  %2166 = vmatpush1.bf16.msra.mxu0 0
  %2167 = vmatprep.subr.bf16.mxu0 0
  %2168 = vmatpush1.bf16.msra.mxu0 0
  %2169 = vmatprep.subr.bf16.mxu0 0
  %2170 = vmatpush1.bf16.msra.mxu0 0
  %2171 = vmatprep.mubr.bf16.mxu0 %v2137
  %2172 = vmatmul.mubr.bf16.gmra.mrb[0].mxu0 %v2030
  %v2173 = vpop.f32.mrb[0].mxu0
  %v2174 = vadd.f32 %v2061, %v2173
  %v2175 = vpop.f32.mrb[0].mxu0
  %v2176 = vpop.f32.mrb[0].mxu0
  %v2177 = vpop.f32.mrb[0].mxu0
  %2178 = vdwg.mxu0
  %v2179 = vmax.f32 %v2174, 0.0
  %v2180 = vpack.c.bf16 %v2179, %v2179
  %v2181 = vld [vmem:[%s7] sm:$0xf]
  %v2182 = vld [vmem:[%s7 + $0x4] sm:$0xf]
  %v2183 = vld [vmem:[%s7 + $0x8] sm:$0xf]
  %v2184 = vld [vmem:[%s7 + $0xc] sm:$0xf]
  %v2185 = vld [vmem:[%s7 + $0x10] sm:$0xf]
  %v2186 = vld [vmem:[%s7 + $0x14] sm:$0xf]
  %v2187 = vld [vmem:[%s7 + $0x18] sm:$0xf]
  %v2188 = vld [vmem:[%s7 + $0x1c] sm:$0xf]
  %v2189 = vld [vmem:[%s7 + $0x20] sm:$0xf]
  %v2190 = vld [vmem:[%s7 + $0x24] sm:$0xf]
  %v2191 = vld [vmem:[%s7 + $0x28] sm:$0xf]
  %v2192 = vld [vmem:[%s7 + $0x2c] sm:$0xf]
  %v2193 = vld [vmem:[%s7 + $0x30] sm:$0xf]
  %v2194 = vld [vmem:[%s7 + $0x34] sm:$0xf]
  %v2195 = vld [vmem:[%s7 + $0x38] sm:$0xf]
  %v2196 = vld [vmem:[%s7 + $0x3c] sm:$0xf]
  %v2197 = vld [vmem:[%s8] sm:$0x1]
  %v2199 = vlaneseq
  %v2200 = vshrl.u32 %v2199, 7
  %v2201 = vsub.s32 0, %v2200
  %v2202 = vrot.slane %v2197, %v2201
  %v2220 = vunpack.c.l.b16 %v2181
  %v2221 = vunpack.c.l.b16 %v2182
  %v2222 = vunpack.c.l.b16 %v2183
  %v2223 = vunpack.c.l.b16 %v2184
  %v2224 = vunpack.c.l.b16 %v2185
  %v2225 = vunpack.c.l.b16 %v2186
  %v2226 = vunpack.c.l.b16 %v2187
  %v2227 = vunpack.c.l.b16 %v2188
  %v2228 = vunpack.c.l.b16 %v2189
  %v2229 = vunpack.c.l.b16 %v2190
  %v2230 = vunpack.c.l.b16 %v2191
  %v2231 = vunpack.c.l.b16 %v2192
  %v2232 = vunpack.c.l.b16 %v2193
  %v2233 = vunpack.c.l.b16 %v2194
  %v2234 = vunpack.c.l.b16 %v2195
  %v2235 = vunpack.c.l.b16 %v2196
  %v2236 = vpack.c.b16 %v2221, %v2220
  %v2237 = vpack.c.b16 %v2223, %v2222
  %v2238 = vpack.c.b16 %v2225, %v2224
  %v2239 = vpack.c.b16 %v2227, %v2226
  %v2240 = vpack.c.b16 %v2229, %v2228
  %v2241 = vpack.c.b16 %v2231, %v2230
  %v2242 = vpack.c.b16 %v2233, %v2232
  %v2243 = vpack.c.b16 %v2235, %v2234
  %2252 = vmatprep.subr.bf16.mxu0 0
  %2253 = vmatpush1.bf16.msra.mxu0 %v2236
  %2254 = vmatprep.subr.bf16.mxu0 0
  %2255 = vmatpush1.bf16.msra.mxu0 %v2237
  %2256 = vmatprep.subr.bf16.mxu0 0
  %2257 = vmatpush1.bf16.msra.mxu0 %v2238
  %2258 = vmatprep.subr.bf16.mxu0 0
  %2259 = vmatpush1.bf16.msra.mxu0 %v2239
  %2260 = vmatprep.subr.bf16.mxu0 0
  %2261 = vmatpush1.bf16.msra.mxu0 %v2240
  %2262 = vmatprep.subr.bf16.mxu0 0
  %2263 = vmatpush1.bf16.msra.mxu0 %v2241
  %2264 = vmatprep.subr.bf16.mxu0 0
  %2265 = vmatpush1.bf16.msra.mxu0 %v2242
  %2266 = vmatprep.subr.bf16.mxu0 0
  %2267 = vmatpush1.bf16.msra.mxu0 %v2243
  %2268 = vmatprep.subr.bf16.mxu0 0
  %2269 = vmatpush1.bf16.msra.mxu0 0
  %2270 = vmatprep.subr.bf16.mxu0 0
  %2271 = vmatpush1.bf16.msra.mxu0 0
  %2272 = vmatprep.subr.bf16.mxu0 0
  %2273 = vmatpush1.bf16.msra.mxu0 0
  %2274 = vmatprep.subr.bf16.mxu0 0
  %2275 = vmatpush1.bf16.msra.mxu0 0
  %2276 = vmatprep.subr.bf16.mxu0 0
  %2277 = vmatpush1.bf16.msra.mxu0 0
  %2278 = vmatprep.subr.bf16.mxu0 0
  %2279 = vmatpush1.bf16.msra.mxu0 0
  %2280 = vmatprep.subr.bf16.mxu0 0
  %2281 = vmatpush1.bf16.msra.mxu0 0
  %2282 = vmatprep.subr.bf16.mxu0 0
  %2283 = vmatpush1.bf16.msra.mxu0 0
  %2284 = vmatprep.mubr.bf16.mxu0 0
  %2285 = vmatmul.mubr.bf16.gmra.mrb[0].mxu0 %v2180
  %v2286 = vpop.f32.mrb[0].mxu0
  %v2287 = vadd.f32 %v2202, %v2286
  %v2288 = vpop.f32.mrb[0].mxu0
  %v2289 = vpop.f32.mrb[0].mxu0
  %v2290 = vpop.f32.mrb[0].mxu0
  %2291 = vdwg.mxu0
  %v2292 = vld [vmem:[%s2] sm:$0x3]
  %v2293 = vadd.f32 %v2292, 1e-20
  %v2294 = vlog2.pop %v2293
  %v2295 = vmul.f32 %v2294, 0.6931472
  %v2296 = vsub.f32 0.0, %v2295
  %v2297 = vadd.f32 %v2296, 1e-20
  %v2298 = vlog2.pop %v2297
  %v2299 = vmul.f32 %v2298, 0.6931472
  %v2300 = vsub.f32 0.0, %v2299
  %s2301 = sld [smem:[#allocation2]]
  %v2302 = vadd.f32 %v2287, %v2300
  %v2303 = vstv %s2301
  %v2304 = vmul.f32 %v2302, %v2303
  %v2305 = vxor.u32 %v2304, 2147483648
  %v2306 = vmul.f32 %v2305, 1.442695
  %v2307 = vpow.pop %v2306
  %v2308 = vadd.f32 %v2307, 1.0
  %v2309 = vrcp.pop %v2308
  %v2310 = vmul.f32 1.0, %v2309
  %v2311 = vxor.u32 %v2287, 2147483648
  %v2312 = vmul.f32 %v2311, 1.442695
  %v2313 = vpow.pop %v2312
  %v2314 = vadd.f32 %v2313, 1.0
  %v2315 = vrcp.pop %v2314
  %v2316 = vmul.f32 1.0, %v2315
  %v2317 = vmul.f32 %v2316, 2.0
  %v2318 = vlaneseq
  %v2319 = vand.u32 %v2318, 127
  %vm2320 = vcmp.lt.s32.totalorder %v2319, 16
  %v2321 = vsel %vm2320, %v2310, %v2317
  %vm2322 = vcmask 189440
  %2323 = vst.msk [vmem:[%s9] sm:$0x3] %vm2322, %v2321
  // Predicated region
  $region38: #{_forward_impl.1} parent=0 // pred_check
    _
  $region39: #{_forward_impl.1} parent=0 // pred_check_branch
    %2325 = sbr.rel (0) target = $region41
  $region40: #{_forward_impl.1} parent=0 // pred_region
    _
  $region41: #{_forward_impl.1} parent=0 // pred_fallthru
    _
  // Predicated region
  $region42: #{_forward_impl.1} parent=0 // pred_check
    _
  $region43: #{_forward_impl.1} parent=0 // pred_check_branch
    %2327 = sbr.rel (0) target = $region45
  $region44: #{_forward_impl.1} parent=0 // pred_region
    _
  $region45: #{_forward_impl.1} parent=0 // pred_fallthru
    _

</llo_original>
